<compile_context>
chip_gen: v6e
topology: v6e:2x2x1
jax: 0.10.0
libtpu: 0.0.40
codegen_flags: <defaults>
</compile_context>

<pallas_src>
import jax
import jax.numpy as jnp
from jax import lax
from jax.experimental import pallas as pl
from jax.experimental.pallas import tpu as pltpu


def _round_up(x, m):
    return (x + m - 1) // m * m


def _pick_tile(dim, candidates):
    for c in candidates:
        if c <= dim and dim % c == 0:
            return c
    return dim


# ---------------------------------------------------------------------------
# Tiled matmul + bias kernel (used for the x-gates precompute and the final
# hidden -> vocab projection).  bf16 operands, f32 accumulation, f32 output.
# ---------------------------------------------------------------------------
def _matmul_bias_kernel(x_ref, w_ref, b_ref, o_ref):
    acc = jnp.dot(x_ref[...], w_ref[...], preferred_element_type=jnp.float32)
    o_ref[...] = (acc + b_ref[...]).astype(o_ref.dtype)


def matmul_bias(x, w, b):
    """x: (M, K) bf16, w: (K, N) bf16, b: (1, N) f32 -> (M, N) f32.

    M is a multiple of 8 and N a multiple of 128 (guaranteed by padding).
    """
    M, K = x.shape
    _, N = w.shape
    bm = _pick_tile(M, (256, 128, 64, 32, 16, 8))
    bn = _pick_tile(N, (512, 256, 128))      # tiles V so W_out fits v7x VMEM
    grid = (M // bm, N // bn)
    return pl.pallas_call(
        _matmul_bias_kernel,
        out_shape=jax.ShapeDtypeStruct((M, N), jnp.float32),
        grid=grid,
        in_specs=[
            pl.BlockSpec((bm, K), lambda i, j: (i, 0)),
            pl.BlockSpec((K, bn), lambda i, j: (0, j)),
            pl.BlockSpec((1, bn), lambda i, j: (0, j)),
        ],
        out_specs=pl.BlockSpec((bm, bn), lambda i, j: (i, j)),
        compiler_params=pltpu.CompilerParams(
            dimension_semantics=("parallel", "parallel")),
        cost_estimate=pl.CostEstimate(
            flops=2 * M * N * K,
            transcendentals=0,
            bytes_accessed=2 * (M * K + K * N) + 4 * (N + M * N)),
    )(x, w, b)


# ---------------------------------------------------------------------------
# LSTM recurrence kernel: time loop fully inside the kernel; only the
# truly-serial work (h @ W_hh + gate nonlinearities + c/h update) per step.
# ---------------------------------------------------------------------------
def _lstm_recurrence_kernel(xg_ref, whh_ref, h_all_ref):
    T, bb, _ = xg_ref.shape
    Hp = whh_ref.shape[0]
    w_hh = whh_ref[...]                                   # (Hp, 4Hp) bf16

    h0 = jnp.zeros((bb, Hp), jnp.float32)
    c0 = jnp.zeros((bb, Hp), jnp.float32)

    def step(t, carry):
        h_prev, c_prev = carry
        # x @ W_ih and both biases were precomputed into xg_ref.
        gates = xg_ref[t] + jnp.dot(h_prev.astype(jnp.bfloat16), w_hh,
                                    preferred_element_type=jnp.float32)
        i = jax.nn.sigmoid(gates[:, 0 * Hp:1 * Hp])       # PyTorch order i,f,g,o
        f = jax.nn.sigmoid(gates[:, 1 * Hp:2 * Hp])
        g = jnp.tanh(gates[:, 2 * Hp:3 * Hp])
        o = jax.nn.sigmoid(gates[:, 3 * Hp:4 * Hp])
        c_new = f * c_prev + i * g
        h_new = o * jnp.tanh(c_new)
        h_all_ref[t] = h_new.astype(h_all_ref.dtype)
        return h_new, c_new

    unroll = True if T <= 16 else 4
    lax.fori_loop(0, T, step, (h0, c0), unroll=unroll)


def lstm_recurrence(x_gates, w_hh):
    """x_gates: (T, Bp, 4Hp) f32, w_hh: (Hp, 4Hp) bf16 -> (T, Bp, Hp) bf16."""
    T, Bp, H4 = x_gates.shape
    Hp = w_hh.shape[0]
    # Batch is embarrassingly parallel: expose it as a "parallel" grid axis so
    # multi-TensorCore parts (v7x) can split it; single block otherwise.
    bb = Bp // 2 if Bp % 16 == 0 else Bp
    nb = Bp // bb
    return pl.pallas_call(
        _lstm_recurrence_kernel,
        out_shape=jax.ShapeDtypeStruct((T, Bp, Hp), jnp.bfloat16),
        grid=(nb,),
        in_specs=[
            pl.BlockSpec((T, bb, H4), lambda b: (0, b, 0)),
            # Loop-invariant weight: whole array resident in VMEM,
            # not double-buffered per grid step.
            pl.BlockSpec(memory_space=pltpu.MemorySpace.VMEM),
        ],
        out_specs=pl.BlockSpec((T, bb, Hp), lambda b: (0, b, 0)),
        compiler_params=pltpu.CompilerParams(
            dimension_semantics=("parallel",)),
        cost_estimate=pl.CostEstimate(
            flops=2 * T * Bp * Hp * H4 + 12 * T * Bp * Hp,
            transcendentals=5 * T * Bp * Hp,
            bytes_accessed=4 * T * Bp * H4 + 2 * Hp * H4 + 2 * T * Bp * Hp),
    )(x_gates, w_hh)


# ---------------------------------------------------------------------------
# Parameter prep: pad to TPU-aligned shapes, cast matmul weights to bf16.
# ---------------------------------------------------------------------------
def prepare_params(params):
    """Gate blocks (i,f,g,o) are each padded to Hp so the in-kernel gate
    slices land on 128-lane boundaries; zero padding keeps padded hidden
    units exactly 0 for all time steps, so results are unchanged."""
    E = params["w_ih"].shape[0]
    H = params["w_hh"].shape[0]
    V = params["w_out"].shape[1]
    Ep, Hp, Vp = _round_up(E, 128), _round_up(H, 128), _round_up(V, 128)

    def pad_gates(w, rows, rows_p):
        out = jnp.zeros((rows_p, 4 * Hp), jnp.float32)
        for g in range(4):
            out = out.at[:rows, g * Hp:g * Hp + H].set(w[:, g * H:(g + 1) * H])
        return out

    b_p = jnp.zeros((1, 4 * Hp), jnp.float32)
    for g in range(4):
        b_p = b_p.at[:, g * Hp:g * Hp + H].set(params["b"][:, g * H:(g + 1) * H])

    w_out_p = jnp.zeros((Hp, Vp), jnp.float32).at[:H, :V].set(params["w_out"])
    b_out_p = jnp.zeros((1, Vp), jnp.float32).at[:, :V].set(params["b_out"])

    return {
        "embed": params["embed"],
        "w_ih": pad_gates(params["w_ih"], E, Ep).astype(jnp.bfloat16),
        "w_hh": pad_gates(params["w_hh"], H, Hp).astype(jnp.bfloat16),
        "b": b_p,
        "w_out": w_out_p.astype(jnp.bfloat16),
        "b_out": b_out_p,
        "E": E, "H": H, "V": V, "Ep": Ep, "Hp": Hp, "Vp": Vp,
    }


def decoder_forward(features, captions, prep):
    """features: (B, E) f32, captions: (B, T) int32 -> (B, T, V) f32."""
    Ep, Hp, Vp, V = prep["Ep"], prep["Hp"], prep["Vp"], prep["V"]

    # Embedding lookup + feature prepend (XLA; data-dependent gather).
    emb = jnp.take(prep["embed"], captions[:, :-1], axis=0)       # (B, T-1, E)
    x = jnp.concatenate([features[:, None, :], emb], axis=1)      # (B, T, E)
    B, T, E = x.shape
    Bp = _round_up(B, 8)

    # Time-major, sublane/lane padded.
    x = jnp.transpose(x, (1, 0, 2))                               # (T, B, E)
    x = jnp.pad(x, ((0, 0), (0, Bp - B), (0, Ep - E)))
    x = x.reshape(T * Bp, Ep).astype(jnp.bfloat16)

    # 1) Input-gate path for all timesteps at once (biases folded in here).
    xg = matmul_bias(x, prep["w_ih"], prep["b"])                  # (T*Bp, 4Hp)
    xg = xg.reshape(T, Bp, 4 * Hp)

    # 2) Serial LSTM recurrence.
    h_all = lstm_recurrence(xg, prep["w_hh"])                     # (T,Bp,Hp) bf16

    # 3) Hidden -> vocab projection batched over all T*Bp rows.
    logits = matmul_bias(h_all.reshape(T * Bp, Hp),
                         prep["w_out"], prep["b_out"])            # (T*Bp, Vp)
    logits = logits.reshape(T, Bp, Vp)

    # Dropout(p=0) is identity.  Back to batch-first, un-padded shape.
    return jnp.transpose(logits, (1, 0, 2))[:B, :, :V]


# ---------------------------------------------------------------------------
# Pure-JAX f32 reference (lax.scan LSTM) for correctness checking.
# ---------------------------------------------------------------------------
def reference_forward(features, captions, params):
    emb = jnp.take(params["embed"], captions[:, :-1], axis=0)
    x = jnp.concatenate([features[:, None, :], emb], axis=1)
    x_tbe = jnp.transpose(x, (1, 0, 2))
    B = x.shape[0]
    H = params["w_hh"].shape[0]

    def step(carry, xt):
        h, c = carry
        gates = xt @ params["w_ih"] + h @ params["w_hh"] + params["b"]
        i = jax.nn.sigmoid(gates[:, 0 * H:1 * H])
        f = jax.nn.sigmoid(gates[:, 1 * H:2 * H])
        g = jnp.tanh(gates[:, 2 * H:3 * H])
        o = jax.nn.sigmoid(gates[:, 3 * H:4 * H])
        c = f * c + i * g
        h = o * jnp.tanh(c)
        return (h, c), h

    h0 = jnp.zeros((B, H), jnp.float32)
    _, hs = lax.scan(step, (h0, h0), x_tbe)
    logits = hs @ params["w_out"] + params["b_out"]
    return jnp.transpose(logits, (1, 0, 2))


def init_params(key, embed_size, hidden_size, vocab_size):
    ks = jax.random.split(key, 6)
    s = 1.0 / jnp.sqrt(hidden_size)
    return {
        # nn.Embedding: N(0,1)
        "embed": jax.random.normal(ks[0], (vocab_size, embed_size), jnp.float32),
        # nn.LSTM weights stored pre-transposed: x @ W_ih (E,4H), h @ W_hh (H,4H)
        "w_ih": jax.random.uniform(ks[1], (embed_size, 4 * hidden_size),
                                   jnp.float32, -s, s),
        "w_hh": jax.random.uniform(ks[2], (hidden_size, 4 * hidden_size),
                                   jnp.float32, -s, s),
        # b_ih + b_hh folded into one bias
        "b": jax.random.uniform(ks[3], (1, 4 * hidden_size), jnp.float32, -s, s),
        # nn.Linear stored pre-transposed: h @ W_out (H,V)
        "w_out": jax.random.uniform(ks[4], (hidden_size, vocab_size),
                                    jnp.float32, -s, s),
        "b_out": jax.random.uniform(ks[5], (1, vocab_size), jnp.float32, -s, s),
    }


if __name__ == "__main__":
    B, T_CAP = 2, 8
    EMBED, HIDDEN, VOCAB = 32, 32, 32

    key = jax.random.PRNGKey(0)
    k_par, k_feat, k_cap = jax.random.split(key, 3)
    params = init_params(k_par, EMBED, HIDDEN, VOCAB)
    prep = prepare_params(params)

    features = jax.random.normal(k_feat, (B, EMBED), jnp.float32)
    captions = jax.random.randint(k_cap, (B, T_CAP), 0, VOCAB, jnp.int32)

    fwd = jax.jit(lambda f, c: decoder_forward(f, c, prep))
    out = jax.block_until_ready(fwd(features, captions))
    assert out.shape == (B, T_CAP, VOCAB), out.shape

    ref = jax.block_until_ready(reference_forward(features, captions, params))
    # bf16 weights / activations with f32 accumulation -> relaxed tolerance
    # vs the pure-f32 reference.
    err = float(jnp.max(jnp.abs(out - ref)))
    assert err < 5e-2, err

    # TODO(synk): DecoderRNN.sample() (greedy decode loop) is not part of
    # forward() and is not implemented here.
    print("KERNEL_OK")
</pallas_src>

<mosaic_0001>
module attributes {stable_mosaic.version = 11 : i64} {
  func.func @_lstm_recurrence_kernel(%arg0: i32, %arg1: memref<8x8x512xf32, #tpu.memory_space<vmem>>, %arg2: memref<128x512xbf16, #tpu.memory_space<vmem>>, %arg3: memref<8x8x128xbf16, #tpu.memory_space<vmem>>) attributes {dimension_semantics = [#tpu.dimension_semantics<parallel>], iteration_bounds = array<i64: 1>, scalar_prefetch = 0 : i64, scratch_operands = 0 : i64, tpu.core_type = #tpu.core_type<tc>, window_params = [{transform_indices = @transform_0, window_bounds = array<i64: 8, 8, 512>}, {pipeline_mode = #tpu.pipeline_mode<synchronous>, transform_indices = @transform_1, window_bounds = array<i64: 128, 512>}, {transform_indices = @transform_2, window_bounds = array<i64: 8, 8, 128>}]} {
    %c0 = arith.constant 0 : index
    %c0_0 = arith.constant 0 : index
    %0 = vector.load %arg2[%c0, %c0_0] : memref<128x512xbf16, #tpu.memory_space<vmem>>, vector<128x512xbf16>
    %cst = arith.constant 0.000000e+00 : f32
    %1 = vector.broadcast %cst : f32 to vector<8x128xf32>
    %cst_1 = arith.constant 0.000000e+00 : f32
    %2 = vector.broadcast %cst_1 : f32 to vector<8x128xf32>
    %c0_i32 = arith.constant 0 : i32
    %3 = arith.index_cast %c0_i32 : i32 to index
    %c0_2 = arith.constant 0 : index
    %c0_3 = arith.constant 0 : index
    %4 = vector.load %arg1[%3, %c0_2, %c0_3] : memref<8x8x512xf32, #tpu.memory_space<vmem>>, vector<1x8x512xf32>
    %5 = vector.shape_cast %4 : vector<1x8x512xf32> to vector<8x512xf32>
    %6 = arith.truncf %1 : vector<8x128xf32> to vector<8x128xbf16>
    %cst_4 = arith.constant dense<0.000000e+00> : vector<8x512xf32>
    %7 = tpu.matmul %6, %0, %cst_4 {dimension_numbers = #tpu.dot_dimension_numbers<[1], [0], [0], [1], [0, 0, 1, 1], [], []>} : vector<8x128xbf16>, vector<128x512xbf16>, vector<8x512xf32> -> vector<8x512xf32>
    %8 = arith.addf %5, %7 : vector<8x512xf32>
    %9 = vector.extract_strided_slice %8 {offsets = [0, 0], sizes = [8, 128], strides = [1, 1]} : vector<8x512xf32> to vector<8x128xf32>
    %10 = arith.negf %9 : vector<8x128xf32>
    %11 = math.exp %10 : vector<8x128xf32>
    %cst_5 = arith.constant 1.000000e+00 : f32
    %12 = vector.broadcast %cst_5 : f32 to vector<8x128xf32>
    %13 = arith.addf %12, %11 : vector<8x128xf32>
    %14 = arith.divf %12, %13 : vector<8x128xf32>
    %15 = vector.extract_strided_slice %8 {offsets = [0, 128], sizes = [8, 128], strides = [1, 1]} : vector<8x512xf32> to vector<8x128xf32>
    %16 = arith.negf %15 : vector<8x128xf32>
    %17 = math.exp %16 : vector<8x128xf32>
    %cst_6 = arith.constant 1.000000e+00 : f32
    %18 = vector.broadcast %cst_6 : f32 to vector<8x128xf32>
    %19 = arith.addf %18, %17 : vector<8x128xf32>
    %20 = arith.divf %18, %19 : vector<8x128xf32>
    %21 = vector.extract_strided_slice %8 {offsets = [0, 256], sizes = [8, 128], strides = [1, 1]} : vector<8x512xf32> to vector<8x128xf32>
    %22 = math.tanh %21 : vector<8x128xf32>
    %23 = vector.extract_strided_slice %8 {offsets = [0, 384], sizes = [8, 128], strides = [1, 1]} : vector<8x512xf32> to vector<8x128xf32>
    %24 = arith.negf %23 : vector<8x128xf32>
    %25 = math.exp %24 : vector<8x128xf32>
    %cst_7 = arith.constant 1.000000e+00 : f32
    %26 = vector.broadcast %cst_7 : f32 to vector<8x128xf32>
    %27 = arith.addf %26, %25 : vector<8x128xf32>
    %28 = arith.divf %26, %27 : vector<8x128xf32>
    %29 = arith.mulf %20, %2 : vector<8x128xf32>
    %30 = arith.mulf %14, %22 : vector<8x128xf32>
    %31 = arith.addf %29, %30 : vector<8x128xf32>
    %32 = math.tanh %31 : vector<8x128xf32>
    %33 = arith.mulf %28, %32 : vector<8x128xf32>
    %34 = arith.truncf %33 : vector<8x128xf32> to vector<8x128xbf16>
    %35 = arith.index_cast %c0_i32 : i32 to index
    %c0_8 = arith.constant 0 : index
    %c0_9 = arith.constant 0 : index
    %36 = vector.load %arg3[%35, %c0_8, %c0_9] : memref<8x8x128xbf16, #tpu.memory_space<vmem>>, vector<1x8x128xbf16>
    %37 = vector.shape_cast %36 : vector<1x8x128xbf16> to vector<8x128xbf16>
    %38 = vector.shape_cast %34 : vector<8x128xbf16> to vector<1x8x128xbf16>
    tpu.vector_store %arg3[%35, %c0_8, %c0_9], %38 {strides = array<i32>} : memref<8x8x128xbf16, #tpu.memory_space<vmem>>, vector<1x8x128xbf16>,
    %c1_i32 = arith.constant 1 : i32
    %39 = arith.index_cast %c1_i32 : i32 to index
    %c0_10 = arith.constant 0 : index
    %c0_11 = arith.constant 0 : index
    %40 = vector.load %arg1[%39, %c0_10, %c0_11] : memref<8x8x512xf32, #tpu.memory_space<vmem>>, vector<1x8x512xf32>
    %41 = vector.shape_cast %40 : vector<1x8x512xf32> to vector<8x512xf32>
    %42 = arith.truncf %33 : vector<8x128xf32> to vector<8x128xbf16>
    %cst_12 = arith.constant dense<0.000000e+00> : vector<8x512xf32>
    %43 = tpu.matmul %42, %0, %cst_12 {dimension_numbers = #tpu.dot_dimension_numbers<[1], [0], [0], [1], [0, 0, 1, 1], [], []>} : vector<8x128xbf16>, vector<128x512xbf16>, vector<8x512xf32> -> vector<8x512xf32>
    %44 = arith.addf %41, %43 : vector<8x512xf32>
    %45 = vector.extract_strided_slice %44 {offsets = [0, 0], sizes = [8, 128], strides = [1, 1]} : vector<8x512xf32> to vector<8x128xf32>
    %46 = arith.negf %45 : vector<8x128xf32>
    %47 = math.exp %46 : vector<8x128xf32>
    %cst_13 = arith.constant 1.000000e+00 : f32
    %48 = vector.broadcast %cst_13 : f32 to vector<8x128xf32>
    %49 = arith.addf %48, %47 : vector<8x128xf32>
    %50 = arith.divf %48, %49 : vector<8x128xf32>
    %51 = vector.extract_strided_slice %44 {offsets = [0, 128], sizes = [8, 128], strides = [1, 1]} : vector<8x512xf32> to vector<8x128xf32>
    %52 = arith.negf %51 : vector<8x128xf32>
    %53 = math.exp %52 : vector<8x128xf32>
    %cst_14 = arith.constant 1.000000e+00 : f32
    %54 = vector.broadcast %cst_14 : f32 to vector<8x128xf32>
    %55 = arith.addf %54, %53 : vector<8x128xf32>
    %56 = arith.divf %54, %55 : vector<8x128xf32>
    %57 = vector.extract_strided_slice %44 {offsets = [0, 256], sizes = [8, 128], strides = [1, 1]} : vector<8x512xf32> to vector<8x128xf32>
    %58 = math.tanh %57 : vector<8x128xf32>
    %59 = vector.extract_strided_slice %44 {offsets = [0, 384], sizes = [8, 128], strides = [1, 1]} : vector<8x512xf32> to vector<8x128xf32>
    %60 = arith.negf %59 : vector<8x128xf32>
    %61 = math.exp %60 : vector<8x128xf32>
    %cst_15 = arith.constant 1.000000e+00 : f32
    %62 = vector.broadcast %cst_15 : f32 to vector<8x128xf32>
    %63 = arith.addf %62, %61 : vector<8x128xf32>
    %64 = arith.divf %62, %63 : vector<8x128xf32>
    %65 = arith.mulf %56, %31 : vector<8x128xf32>
    %66 = arith.mulf %50, %58 : vector<8x128xf32>
    %67 = arith.addf %65, %66 : vector<8x128xf32>
    %68 = math.tanh %67 : vector<8x128xf32>
    %69 = arith.mulf %64, %68 : vector<8x128xf32>
    %70 = arith.truncf %69 : vector<8x128xf32> to vector<8x128xbf16>
    %71 = arith.index_cast %c1_i32 : i32 to index
    %c0_16 = arith.constant 0 : index
    %c0_17 = arith.constant 0 : index
    %72 = vector.load %arg3[%71, %c0_16, %c0_17] : memref<8x8x128xbf16, #tpu.memory_space<vmem>>, vector<1x8x128xbf16>
    %73 = vector.shape_cast %72 : vector<1x8x128xbf16> to vector<8x128xbf16>
    %74 = vector.shape_cast %70 : vector<8x128xbf16> to vector<1x8x128xbf16>
    tpu.vector_store %arg3[%71, %c0_16, %c0_17], %74 {strides = array<i32>} : memref<8x8x128xbf16, #tpu.memory_space<vmem>>, vector<1x8x128xbf16>,
    %c2_i32 = arith.constant 2 : i32
    %75 = arith.index_cast %c2_i32 : i32 to index
    %c0_18 = arith.constant 0 : index
    %c0_19 = arith.constant 0 : index
    %76 = vector.load %arg1[%75, %c0_18, %c0_19] : memref<8x8x512xf32, #tpu.memory_space<vmem>>, vector<1x8x512xf32>
    %77 = vector.shape_cast %76 : vector<1x8x512xf32> to vector<8x512xf32>
    %78 = arith.truncf %69 : vector<8x128xf32> to vector<8x128xbf16>
    %cst_20 = arith.constant dense<0.000000e+00> : vector<8x512xf32>
    %79 = tpu.matmul %78, %0, %cst_20 {dimension_numbers = #tpu.dot_dimension_numbers<[1], [0], [0], [1], [0, 0, 1, 1], [], []>} : vector<8x128xbf16>, vector<128x512xbf16>, vector<8x512xf32> -> vector<8x512xf32>
    %80 = arith.addf %77, %79 : vector<8x512xf32>
    %81 = vector.extract_strided_slice %80 {offsets = [0, 0], sizes = [8, 128], strides = [1, 1]} : vector<8x512xf32> to vector<8x128xf32>
    %82 = arith.negf %81 : vector<8x128xf32>
    %83 = math.exp %82 : vector<8x128xf32>
    %cst_21 = arith.constant 1.000000e+00 : f32
    %84 = vector.broadcast %cst_21 : f32 to vector<8x128xf32>
    %85 = arith.addf %84, %83 : vector<8x128xf32>
    %86 = arith.divf %84, %85 : vector<8x128xf32>
    %87 = vector.extract_strided_slice %80 {offsets = [0, 128], sizes = [8, 128], strides = [1, 1]} : vector<8x512xf32> to vector<8x128xf32>
    %88 = arith.negf %87 : vector<8x128xf32>
    %89 = math.exp %88 : vector<8x128xf32>
    %cst_22 = arith.constant 1.000000e+00 : f32
    %90 = vector.broadcast %cst_22 : f32 to vector<8x128xf32>
    %91 = arith.addf %90, %89 : vector<8x128xf32>
    %92 = arith.divf %90, %91 : vector<8x128xf32>
    %93 = vector.extract_strided_slice %80 {offsets = [0, 256], sizes = [8, 128], strides = [1, 1]} : vector<8x512xf32> to vector<8x128xf32>
    %94 = math.tanh %93 : vector<8x128xf32>
    %95 = vector.extract_strided_slice %80 {offsets = [0, 384], sizes = [8, 128], strides = [1, 1]} : vector<8x512xf32> to vector<8x128xf32>
    %96 = arith.negf %95 : vector<8x128xf32>
    %97 = math.exp %96 : vector<8x128xf32>
    %cst_23 = arith.constant 1.000000e+00 : f32
    %98 = vector.broadcast %cst_23 : f32 to vector<8x128xf32>
    %99 = arith.addf %98, %97 : vector<8x128xf32>
    %100 = arith.divf %98, %99 : vector<8x128xf32>
    %101 = arith.mulf %92, %67 : vector<8x128xf32>
    %102 = arith.mulf %86, %94 : vector<8x128xf32>
    %103 = arith.addf %101, %102 : vector<8x128xf32>
    %104 = math.tanh %103 : vector<8x128xf32>
    %105 = arith.mulf %100, %104 : vector<8x128xf32>
    %106 = arith.truncf %105 : vector<8x128xf32> to vector<8x128xbf16>
    %107 = arith.index_cast %c2_i32 : i32 to index
    %c0_24 = arith.constant 0 : index
    %c0_25 = arith.constant 0 : index
    %108 = vector.load %arg3[%107, %c0_24, %c0_25] : memref<8x8x128xbf16, #tpu.memory_space<vmem>>, vector<1x8x128xbf16>
    %109 = vector.shape_cast %108 : vector<1x8x128xbf16> to vector<8x128xbf16>
    %110 = vector.shape_cast %106 : vector<8x128xbf16> to vector<1x8x128xbf16>
    tpu.vector_store %arg3[%107, %c0_24, %c0_25], %110 {strides = array<i32>} : memref<8x8x128xbf16, #tpu.memory_space<vmem>>, vector<1x8x128xbf16>,
    %c3_i32 = arith.constant 3 : i32
    %111 = arith.index_cast %c3_i32 : i32 to index
    %c0_26 = arith.constant 0 : index
    %c0_27 = arith.constant 0 : index
    %112 = vector.load %arg1[%111, %c0_26, %c0_27] : memref<8x8x512xf32, #tpu.memory_space<vmem>>, vector<1x8x512xf32>
    %113 = vector.shape_cast %112 : vector<1x8x512xf32> to vector<8x512xf32>
    %114 = arith.truncf %105 : vector<8x128xf32> to vector<8x128xbf16>
    %cst_28 = arith.constant dense<0.000000e+00> : vector<8x512xf32>
    %115 = tpu.matmul %114, %0, %cst_28 {dimension_numbers = #tpu.dot_dimension_numbers<[1], [0], [0], [1], [0, 0, 1, 1], [], []>} : vector<8x128xbf16>, vector<128x512xbf16>, vector<8x512xf32> -> vector<8x512xf32>
    %116 = arith.addf %113, %115 : vector<8x512xf32>
    %117 = vector.extract_strided_slice %116 {offsets = [0, 0], sizes = [8, 128], strides = [1, 1]} : vector<8x512xf32> to vector<8x128xf32>
    %118 = arith.negf %117 : vector<8x128xf32>
    %119 = math.exp %118 : vector<8x128xf32>
    %cst_29 = arith.constant 1.000000e+00 : f32
    %120 = vector.broadcast %cst_29 : f32 to vector<8x128xf32>
    %121 = arith.addf %120, %119 : vector<8x128xf32>
    %122 = arith.divf %120, %121 : vector<8x128xf32>
    %123 = vector.extract_strided_slice %116 {offsets = [0, 128], sizes = [8, 128], strides = [1, 1]} : vector<8x512xf32> to vector<8x128xf32>
    %124 = arith.negf %123 : vector<8x128xf32>
    %125 = math.exp %124 : vector<8x128xf32>
    %cst_30 = arith.constant 1.000000e+00 : f32
    %126 = vector.broadcast %cst_30 : f32 to vector<8x128xf32>
    %127 = arith.addf %126, %125 : vector<8x128xf32>
    %128 = arith.divf %126, %127 : vector<8x128xf32>
    %129 = vector.extract_strided_slice %116 {offsets = [0, 256], sizes = [8, 128], strides = [1, 1]} : vector<8x512xf32> to vector<8x128xf32>
    %130 = math.tanh %129 : vector<8x128xf32>
    %131 = vector.extract_strided_slice %116 {offsets = [0, 384], sizes = [8, 128], strides = [1, 1]} : vector<8x512xf32> to vector<8x128xf32>
    %132 = arith.negf %131 : vector<8x128xf32>
    %133 = math.exp %132 : vector<8x128xf32>
    %cst_31 = arith.constant 1.000000e+00 : f32
    %134 = vector.broadcast %cst_31 : f32 to vector<8x128xf32>
    %135 = arith.addf %134, %133 : vector<8x128xf32>
    %136 = arith.divf %134, %135 : vector<8x128xf32>
    %137 = arith.mulf %128, %103 : vector<8x128xf32>
    %138 = arith.mulf %122, %130 : vector<8x128xf32>
    %139 = arith.addf %137, %138 : vector<8x128xf32>
    %140 = math.tanh %139 : vector<8x128xf32>
    %141 = arith.mulf %136, %140 : vector<8x128xf32>
    %142 = arith.truncf %141 : vector<8x128xf32> to vector<8x128xbf16>
    %143 = arith.index_cast %c3_i32 : i32 to index
    %c0_32 = arith.constant 0 : index
    %c0_33 = arith.constant 0 : index
    %144 = vector.load %arg3[%143, %c0_32, %c0_33] : memref<8x8x128xbf16, #tpu.memory_space<vmem>>, vector<1x8x128xbf16>
    %145 = vector.shape_cast %144 : vector<1x8x128xbf16> to vector<8x128xbf16>
    %146 = vector.shape_cast %142 : vector<8x128xbf16> to vector<1x8x128xbf16>
    tpu.vector_store %arg3[%143, %c0_32, %c0_33], %146 {strides = array<i32>} : memref<8x8x128xbf16, #tpu.memory_space<vmem>>, vector<1x8x128xbf16>,
    %c4_i32 = arith.constant 4 : i32
    %147 = arith.index_cast %c4_i32 : i32 to index
    %c0_34 = arith.constant 0 : index
    %c0_35 = arith.constant 0 : index
    %148 = vector.load %arg1[%147, %c0_34, %c0_35] : memref<8x8x512xf32, #tpu.memory_space<vmem>>, vector<1x8x512xf32>
    %149 = vector.shape_cast %148 : vector<1x8x512xf32> to vector<8x512xf32>
    %150 = arith.truncf %141 : vector<8x128xf32> to vector<8x128xbf16>
    %cst_36 = arith.constant dense<0.000000e+00> : vector<8x512xf32>
    %151 = tpu.matmul %150, %0, %cst_36 {dimension_numbers = #tpu.dot_dimension_numbers<[1], [0], [0], [1], [0, 0, 1, 1], [], []>} : vector<8x128xbf16>, vector<128x512xbf16>, vector<8x512xf32> -> vector<8x512xf32>
    %152 = arith.addf %149, %151 : vector<8x512xf32>
    %153 = vector.extract_strided_slice %152 {offsets = [0, 0], sizes = [8, 128], strides = [1, 1]} : vector<8x512xf32> to vector<8x128xf32>
    %154 = arith.negf %153 : vector<8x128xf32>
    %155 = math.exp %154 : vector<8x128xf32>
    %cst_37 = arith.constant 1.000000e+00 : f32
    %156 = vector.broadcast %cst_37 : f32 to vector<8x128xf32>
    %157 = arith.addf %156, %155 : vector<8x128xf32>
    %158 = arith.divf %156, %157 : vector<8x128xf32>
    %159 = vector.extract_strided_slice %152 {offsets = [0, 128], sizes = [8, 128], strides = [1, 1]} : vector<8x512xf32> to vector<8x128xf32>
    %160 = arith.negf %159 : vector<8x128xf32>
    %161 = math.exp %160 : vector<8x128xf32>
    %cst_38 = arith.constant 1.000000e+00 : f32
    %162 = vector.broadcast %cst_38 : f32 to vector<8x128xf32>
    %163 = arith.addf %162, %161 : vector<8x128xf32>
    %164 = arith.divf %162, %163 : vector<8x128xf32>
    %165 = vector.extract_strided_slice %152 {offsets = [0, 256], sizes = [8, 128], strides = [1, 1]} : vector<8x512xf32> to vector<8x128xf32>
    %166 = math.tanh %165 : vector<8x128xf32>
    %167 = vector.extract_strided_slice %152 {offsets = [0, 384], sizes = [8, 128], strides = [1, 1]} : vector<8x512xf32> to vector<8x128xf32>
    %168 = arith.negf %167 : vector<8x128xf32>
    %169 = math.exp %168 : vector<8x128xf32>
    %cst_39 = arith.constant 1.000000e+00 : f32
    %170 = vector.broadcast %cst_39 : f32 to vector<8x128xf32>
    %171 = arith.addf %170, %169 : vector<8x128xf32>
    %172 = arith.divf %170, %171 : vector<8x128xf32>
    %173 = arith.mulf %164, %139 : vector<8x128xf32>
    %174 = arith.mulf %158, %166 : vector<8x128xf32>
    %175 = arith.addf %173, %174 : vector<8x128xf32>
    %176 = math.tanh %175 : vector<8x128xf32>
    %177 = arith.mulf %172, %176 : vector<8x128xf32>
    %178 = arith.truncf %177 : vector<8x128xf32> to vector<8x128xbf16>
    %179 = arith.index_cast %c4_i32 : i32 to index
    %c0_40 = arith.constant 0 : index
    %c0_41 = arith.constant 0 : index
    %180 = vector.load %arg3[%179, %c0_40, %c0_41] : memref<8x8x128xbf16, #tpu.memory_space<vmem>>, vector<1x8x128xbf16>
    %181 = vector.shape_cast %180 : vector<1x8x128xbf16> to vector<8x128xbf16>
    %182 = vector.shape_cast %178 : vector<8x128xbf16> to vector<1x8x128xbf16>
    tpu.vector_store %arg3[%179, %c0_40, %c0_41], %182 {strides = array<i32>} : memref<8x8x128xbf16, #tpu.memory_space<vmem>>, vector<1x8x128xbf16>,
    %c5_i32 = arith.constant 5 : i32
    %183 = arith.index_cast %c5_i32 : i32 to index
    %c0_42 = arith.constant 0 : index
    %c0_43 = arith.constant 0 : index
    %184 = vector.load %arg1[%183, %c0_42, %c0_43] : memref<8x8x512xf32, #tpu.memory_space<vmem>>, vector<1x8x512xf32>
    %185 = vector.shape_cast %184 : vector<1x8x512xf32> to vector<8x512xf32>
    %186 = arith.truncf %177 : vector<8x128xf32> to vector<8x128xbf16>
    %cst_44 = arith.constant dense<0.000000e+00> : vector<8x512xf32>
    %187 = tpu.matmul %186, %0, %cst_44 {dimension_numbers = #tpu.dot_dimension_numbers<[1], [0], [0], [1], [0, 0, 1, 1], [], []>} : vector<8x128xbf16>, vector<128x512xbf16>, vector<8x512xf32> -> vector<8x512xf32>
    %188 = arith.addf %185, %187 : vector<8x512xf32>
    %189 = vector.extract_strided_slice %188 {offsets = [0, 0], sizes = [8, 128], strides = [1, 1]} : vector<8x512xf32> to vector<8x128xf32>
    %190 = arith.negf %189 : vector<8x128xf32>
    %191 = math.exp %190 : vector<8x128xf32>
    %cst_45 = arith.constant 1.000000e+00 : f32
    %192 = vector.broadcast %cst_45 : f32 to vector<8x128xf32>
    %193 = arith.addf %192, %191 : vector<8x128xf32>
    %194 = arith.divf %192, %193 : vector<8x128xf32>
    %195 = vector.extract_strided_slice %188 {offsets = [0, 128], sizes = [8, 128], strides = [1, 1]} : vector<8x512xf32> to vector<8x128xf32>
    %196 = arith.negf %195 : vector<8x128xf32>
    %197 = math.exp %196 : vector<8x128xf32>
    %cst_46 = arith.constant 1.000000e+00 : f32
    %198 = vector.broadcast %cst_46 : f32 to vector<8x128xf32>
    %199 = arith.addf %198, %197 : vector<8x128xf32>
    %200 = arith.divf %198, %199 : vector<8x128xf32>
    %201 = vector.extract_strided_slice %188 {offsets = [0, 256], sizes = [8, 128], strides = [1, 1]} : vector<8x512xf32> to vector<8x128xf32>
    %202 = math.tanh %201 : vector<8x128xf32>
    %203 = vector.extract_strided_slice %188 {offsets = [0, 384], sizes = [8, 128], strides = [1, 1]} : vector<8x512xf32> to vector<8x128xf32>
    %204 = arith.negf %203 : vector<8x128xf32>
    %205 = math.exp %204 : vector<8x128xf32>
    %cst_47 = arith.constant 1.000000e+00 : f32
    %206 = vector.broadcast %cst_47 : f32 to vector<8x128xf32>
    %207 = arith.addf %206, %205 : vector<8x128xf32>
    %208 = arith.divf %206, %207 : vector<8x128xf32>
    %209 = arith.mulf %200, %175 : vector<8x128xf32>
    %210 = arith.mulf %194, %202 : vector<8x128xf32>
    %211 = arith.addf %209, %210 : vector<8x128xf32>
    %212 = math.tanh %211 : vector<8x128xf32>
    %213 = arith.mulf %208, %212 : vector<8x128xf32>
    %214 = arith.truncf %213 : vector<8x128xf32> to vector<8x128xbf16>
    %215 = arith.index_cast %c5_i32 : i32 to index
    %c0_48 = arith.constant 0 : index
    %c0_49 = arith.constant 0 : index
    %216 = vector.load %arg3[%215, %c0_48, %c0_49] : memref<8x8x128xbf16, #tpu.memory_space<vmem>>, vector<1x8x128xbf16>
    %217 = vector.shape_cast %216 : vector<1x8x128xbf16> to vector<8x128xbf16>
    %218 = vector.shape_cast %214 : vector<8x128xbf16> to vector<1x8x128xbf16>
    tpu.vector_store %arg3[%215, %c0_48, %c0_49], %218 {strides = array<i32>} : memref<8x8x128xbf16, #tpu.memory_space<vmem>>, vector<1x8x128xbf16>,
    %c6_i32 = arith.constant 6 : i32
    %219 = arith.index_cast %c6_i32 : i32 to index
    %c0_50 = arith.constant 0 : index
    %c0_51 = arith.constant 0 : index
    %220 = vector.load %arg1[%219, %c0_50, %c0_51] : memref<8x8x512xf32, #tpu.memory_space<vmem>>, vector<1x8x512xf32>
    %221 = vector.shape_cast %220 : vector<1x8x512xf32> to vector<8x512xf32>
    %222 = arith.truncf %213 : vector<8x128xf32> to vector<8x128xbf16>
    %cst_52 = arith.constant dense<0.000000e+00> : vector<8x512xf32>
    %223 = tpu.matmul %222, %0, %cst_52 {dimension_numbers = #tpu.dot_dimension_numbers<[1], [0], [0], [1], [0, 0, 1, 1], [], []>} : vector<8x128xbf16>, vector<128x512xbf16>, vector<8x512xf32> -> vector<8x512xf32>
    %224 = arith.addf %221, %223 : vector<8x512xf32>
    %225 = vector.extract_strided_slice %224 {offsets = [0, 0], sizes = [8, 128], strides = [1, 1]} : vector<8x512xf32> to vector<8x128xf32>
    %226 = arith.negf %225 : vector<8x128xf32>
    %227 = math.exp %226 : vector<8x128xf32>
    %cst_53 = arith.constant 1.000000e+00 : f32
    %228 = vector.broadcast %cst_53 : f32 to vector<8x128xf32>
    %229 = arith.addf %228, %227 : vector<8x128xf32>
    %230 = arith.divf %228, %229 : vector<8x128xf32>
    %231 = vector.extract_strided_slice %224 {offsets = [0, 128], sizes = [8, 128], strides = [1, 1]} : vector<8x512xf32> to vector<8x128xf32>
    %232 = arith.negf %231 : vector<8x128xf32>
    %233 = math.exp %232 : vector<8x128xf32>
    %cst_54 = arith.constant 1.000000e+00 : f32
    %234 = vector.broadcast %cst_54 : f32 to vector<8x128xf32>
    %235 = arith.addf %234, %233 : vector<8x128xf32>
    %236 = arith.divf %234, %235 : vector<8x128xf32>
    %237 = vector.extract_strided_slice %224 {offsets = [0, 256], sizes = [8, 128], strides = [1, 1]} : vector<8x512xf32> to vector<8x128xf32>
    %238 = math.tanh %237 : vector<8x128xf32>
    %239 = vector.extract_strided_slice %224 {offsets = [0, 384], sizes = [8, 128], strides = [1, 1]} : vector<8x512xf32> to vector<8x128xf32>
    %240 = arith.negf %239 : vector<8x128xf32>
    %241 = math.exp %240 : vector<8x128xf32>
    %cst_55 = arith.constant 1.000000e+00 : f32
    %242 = vector.broadcast %cst_55 : f32 to vector<8x128xf32>
    %243 = arith.addf %242, %241 : vector<8x128xf32>
    %244 = arith.divf %242, %243 : vector<8x128xf32>
    %245 = arith.mulf %236, %211 : vector<8x128xf32>
    %246 = arith.mulf %230, %238 : vector<8x128xf32>
    %247 = arith.addf %245, %246 : vector<8x128xf32>
    %248 = math.tanh %247 : vector<8x128xf32>
    %249 = arith.mulf %244, %248 : vector<8x128xf32>
    %250 = arith.truncf %249 : vector<8x128xf32> to vector<8x128xbf16>
    %251 = arith.index_cast %c6_i32 : i32 to index
    %c0_56 = arith.constant 0 : index
    %c0_57 = arith.constant 0 : index
    %252 = vector.load %arg3[%251, %c0_56, %c0_57] : memref<8x8x128xbf16, #tpu.memory_space<vmem>>, vector<1x8x128xbf16>
    %253 = vector.shape_cast %252 : vector<1x8x128xbf16> to vector<8x128xbf16>
    %254 = vector.shape_cast %250 : vector<8x128xbf16> to vector<1x8x128xbf16>
    tpu.vector_store %arg3[%251, %c0_56, %c0_57], %254 {strides = array<i32>} : memref<8x8x128xbf16, #tpu.memory_space<vmem>>, vector<1x8x128xbf16>,
    %c7_i32 = arith.constant 7 : i32
    %255 = arith.index_cast %c7_i32 : i32 to index
    %c0_58 = arith.constant 0 : index
    %c0_59 = arith.constant 0 : index
    %256 = vector.load %arg1[%255, %c0_58, %c0_59] : memref<8x8x512xf32, #tpu.memory_space<vmem>>, vector<1x8x512xf32>
    %257 = vector.shape_cast %256 : vector<1x8x512xf32> to vector<8x512xf32>
    %258 = arith.truncf %249 : vector<8x128xf32> to vector<8x128xbf16>
    %cst_60 = arith.constant dense<0.000000e+00> : vector<8x512xf32>
    %259 = tpu.matmul %258, %0, %cst_60 {dimension_numbers = #tpu.dot_dimension_numbers<[1], [0], [0], [1], [0, 0, 1, 1], [], []>} : vector<8x128xbf16>, vector<128x512xbf16>, vector<8x512xf32> -> vector<8x512xf32>
    %260 = arith.addf %257, %259 : vector<8x512xf32>
    %261 = vector.extract_strided_slice %260 {offsets = [0, 0], sizes = [8, 128], strides = [1, 1]} : vector<8x512xf32> to vector<8x128xf32>
    %262 = arith.negf %261 : vector<8x128xf32>
    %263 = math.exp %262 : vector<8x128xf32>
    %cst_61 = arith.constant 1.000000e+00 : f32
    %264 = vector.broadcast %cst_61 : f32 to vector<8x128xf32>
    %265 = arith.addf %264, %263 : vector<8x128xf32>
    %266 = arith.divf %264, %265 : vector<8x128xf32>
    %267 = vector.extract_strided_slice %260 {offsets = [0, 128], sizes = [8, 128], strides = [1, 1]} : vector<8x512xf32> to vector<8x128xf32>
    %268 = arith.negf %267 : vector<8x128xf32>
    %269 = math.exp %268 : vector<8x128xf32>
    %cst_62 = arith.constant 1.000000e+00 : f32
    %270 = vector.broadcast %cst_62 : f32 to vector<8x128xf32>
    %271 = arith.addf %270, %269 : vector<8x128xf32>
    %272 = arith.divf %270, %271 : vector<8x128xf32>
    %273 = vector.extract_strided_slice %260 {offsets = [0, 256], sizes = [8, 128], strides = [1, 1]} : vector<8x512xf32> to vector<8x128xf32>
    %274 = math.tanh %273 : vector<8x128xf32>
    %275 = vector.extract_strided_slice %260 {offsets = [0, 384], sizes = [8, 128], strides = [1, 1]} : vector<8x512xf32> to vector<8x128xf32>
    %276 = arith.negf %275 : vector<8x128xf32>
    %277 = math.exp %276 : vector<8x128xf32>
    %cst_63 = arith.constant 1.000000e+00 : f32
    %278 = vector.broadcast %cst_63 : f32 to vector<8x128xf32>
    %279 = arith.addf %278, %277 : vector<8x128xf32>
    %280 = arith.divf %278, %279 : vector<8x128xf32>
    %281 = arith.mulf %272, %247 : vector<8x128xf32>
    %282 = arith.mulf %266, %274 : vector<8x128xf32>
    %283 = arith.addf %281, %282 : vector<8x128xf32>
    %284 = math.tanh %283 : vector<8x128xf32>
    %285 = arith.mulf %280, %284 : vector<8x128xf32>
    %286 = arith.truncf %285 : vector<8x128xf32> to vector<8x128xbf16>
    %287 = arith.index_cast %c7_i32 : i32 to index
    %c0_64 = arith.constant 0 : index
    %c0_65 = arith.constant 0 : index
    %288 = vector.load %arg3[%287, %c0_64, %c0_65] : memref<8x8x128xbf16, #tpu.memory_space<vmem>>, vector<1x8x128xbf16>
    %289 = vector.shape_cast %288 : vector<1x8x128xbf16> to vector<8x128xbf16>
    %290 = vector.shape_cast %286 : vector<8x128xbf16> to vector<1x8x128xbf16>
    tpu.vector_store %arg3[%287, %c0_64, %c0_65], %290 {strides = array<i32>} : memref<8x8x128xbf16, #tpu.memory_space<vmem>>, vector<1x8x128xbf16>,
    %c8_i32 = arith.constant 8 : i32
    return
  }
  func.func @transform_0(%arg0: i32) -> (i32, i32, i32) {
    %c0_i32 = arith.constant 0 : i32
    %c0_i32_0 = arith.constant 0 : i32
    %c0_i32_1 = arith.constant 0 : i32
    return %c0_i32, %arg0, %c0_i32_0 : i32, i32, i32
  }
  func.func @transform_1(%arg0: i32) -> (i32, i32) {
    %c0_i32 = arith.constant 0 : i32
    %c0_i32_0 = arith.constant 0 : i32
    %c0_i32_1 = arith.constant 0 : i32
    return %c0_i32, %c0_i32_0 : i32, i32
  }
  func.func @transform_2(%arg0: i32) -> (i32, i32, i32) {
    %c0_i32 = arith.constant 0 : i32
    %c0_i32_0 = arith.constant 0 : i32
    %c0_i32_1 = arith.constant 0 : i32
    return %c0_i32, %arg0, %c0_i32_0 : i32, i32, i32
  }
}

module attributes {stable_mosaic.version = 11 : i64} {
  func.func @_matmul_bias_kernel(%arg0: i32, %arg1: i32, %arg2: memref<64x128xbf16, #tpu.memory_space<vmem>>, %arg3: memref<128x512xbf16, #tpu.memory_space<vmem>>, %arg4: memref<1x512xf32, #tpu.memory_space<vmem>>, %arg5: memref<64x512xf32, #tpu.memory_space<vmem>>) attributes {dimension_semantics = [#tpu.dimension_semantics<parallel>, #tpu.dimension_semantics<parallel>], iteration_bounds = array<i64: 1, 1>, scalar_prefetch = 0 : i64, scratch_operands = 0 : i64, tpu.core_type = #tpu.core_type<tc>, window_params = [{transform_indices = @transform_0, window_bounds = array<i64: 64, 128>}, {transform_indices = @transform_1, window_bounds = array<i64: 128, 512>}, {transform_indices = @transform_2, window_bounds = array<i64: 1, 512>}, {transform_indices = @transform_3, window_bounds = array<i64: 64, 512>}]} {
    %c0 = arith.constant 0 : index
    %c0_0 = arith.constant 0 : index
    %0 = vector.load %arg2[%c0, %c0_0] : memref<64x128xbf16, #tpu.memory_space<vmem>>, vector<64x128xbf16>
    %c0_1 = arith.constant 0 : index
    %c0_2 = arith.constant 0 : index
    %1 = vector.load %arg3[%c0_1, %c0_2] : memref<128x512xbf16, #tpu.memory_space<vmem>>, vector<128x512xbf16>
    %cst = arith.constant dense<0.000000e+00> : vector<64x512xf32>
    %2 = tpu.matmul %0, %1, %cst {dimension_numbers = #tpu.dot_dimension_numbers<[1], [0], [0], [1], [0, 0, 1, 1], [], []>} : vector<64x128xbf16>, vector<128x512xbf16>, vector<64x512xf32> -> vector<64x512xf32>
    %c0_3 = arith.constant 0 : index
    %c0_4 = arith.constant 0 : index
    %3 = vector.load %arg4[%c0_3, %c0_4] : memref<1x512xf32, #tpu.memory_space<vmem>>, vector<1x512xf32>
    %4 = vector.broadcast %3 : vector<1x512xf32> to vector<64x512xf32>
    %5 = arith.addf %2, %4 : vector<64x512xf32>
    %c0_5 = arith.constant 0 : index
    %c0_6 = arith.constant 0 : index
    %6 = vector.load %arg5[%c0_5, %c0_6] : memref<64x512xf32, #tpu.memory_space<vmem>>, vector<64x512xf32>
    tpu.vector_store %arg5[%c0_5, %c0_6], %5 {strides = array<i32>} : memref<64x512xf32, #tpu.memory_space<vmem>>, vector<64x512xf32>,
    return
  }
  func.func @transform_0(%arg0: i32, %arg1: i32) -> (i32, i32) {
    %c0_i32 = arith.constant 0 : i32
    %c0_i32_0 = arith.constant 0 : i32
    return %arg0, %c0_i32 : i32, i32
  }
  func.func @transform_1(%arg0: i32, %arg1: i32) -> (i32, i32) {
    %c0_i32 = arith.constant 0 : i32
    %c0_i32_0 = arith.constant 0 : i32
    return %c0_i32, %arg1 : i32, i32
  }
  func.func @transform_2(%arg0: i32, %arg1: i32) -> (i32, i32) {
    %c0_i32 = arith.constant 0 : i32
    %c0_i32_0 = arith.constant 0 : i32
    return %c0_i32, %arg1 : i32, i32
  }
  func.func @transform_3(%arg0: i32, %arg1: i32) -> (i32, i32) {
    %c0_i32 = arith.constant 0 : i32
    return %arg0, %arg1 : i32, i32
  }
}

module attributes {stable_mosaic.version = 11 : i64} {
  func.func @_matmul_bias_kernel(%arg0: i32, %arg1: i32, %arg2: memref<64x128xbf16, #tpu.memory_space<vmem>>, %arg3: memref<128x128xbf16, #tpu.memory_space<vmem>>, %arg4: memref<1x128xf32, #tpu.memory_space<vmem>>, %arg5: memref<64x128xf32, #tpu.memory_space<vmem>>) attributes {dimension_semantics = [#tpu.dimension_semantics<parallel>, #tpu.dimension_semantics<parallel>], iteration_bounds = array<i64: 1, 1>, scalar_prefetch = 0 : i64, scratch_operands = 0 : i64, tpu.core_type = #tpu.core_type<tc>, window_params = [{transform_indices = @transform_0, window_bounds = array<i64: 64, 128>}, {transform_indices = @transform_1, window_bounds = array<i64: 128, 128>}, {transform_indices = @transform_2, window_bounds = array<i64: 1, 128>}, {transform_indices = @transform_3, window_bounds = array<i64: 64, 128>}]} {
    %c0 = arith.constant 0 : index
    %c0_0 = arith.constant 0 : index
    %0 = vector.load %arg2[%c0, %c0_0] : memref<64x128xbf16, #tpu.memory_space<vmem>>, vector<64x128xbf16>
    %c0_1 = arith.constant 0 : index
    %c0_2 = arith.constant 0 : index
    %1 = vector.load %arg3[%c0_1, %c0_2] : memref<128x128xbf16, #tpu.memory_space<vmem>>, vector<128x128xbf16>
    %cst = arith.constant dense<0.000000e+00> : vector<64x128xf32>
    %2 = tpu.matmul %0, %1, %cst {dimension_numbers = #tpu.dot_dimension_numbers<[1], [0], [0], [1], [0, 0, 1, 1], [], []>} : vector<64x128xbf16>, vector<128x128xbf16>, vector<64x128xf32> -> vector<64x128xf32>
    %c0_3 = arith.constant 0 : index
    %c0_4 = arith.constant 0 : index
    %3 = vector.load %arg4[%c0_3, %c0_4] : memref<1x128xf32, #tpu.memory_space<vmem>>, vector<1x128xf32>
    %4 = vector.broadcast %3 : vector<1x128xf32> to vector<64x128xf32>
    %5 = arith.addf %2, %4 : vector<64x128xf32>
    %c0_5 = arith.constant 0 : index
    %c0_6 = arith.constant 0 : index
    %6 = vector.load %arg5[%c0_5, %c0_6] : memref<64x128xf32, #tpu.memory_space<vmem>>, vector<64x128xf32>
    tpu.vector_store %arg5[%c0_5, %c0_6], %5 {strides = array<i32>} : memref<64x128xf32, #tpu.memory_space<vmem>>, vector<64x128xf32>,
    return
  }
  func.func @transform_0(%arg0: i32, %arg1: i32) -> (i32, i32) {
    %c0_i32 = arith.constant 0 : i32
    %c0_i32_0 = arith.constant 0 : i32
    return %arg0, %c0_i32 : i32, i32
  }
  func.func @transform_1(%arg0: i32, %arg1: i32) -> (i32, i32) {
    %c0_i32 = arith.constant 0 : i32
    %c0_i32_0 = arith.constant 0 : i32
    return %c0_i32, %arg1 : i32, i32
  }
  func.func @transform_2(%arg0: i32, %arg1: i32) -> (i32, i32) {
    %c0_i32 = arith.constant 0 : i32
    %c0_i32_0 = arith.constant 0 : i32
    return %c0_i32, %arg1 : i32, i32
  }
  func.func @transform_3(%arg0: i32, %arg1: i32) -> (i32, i32) {
    %c0_i32 = arith.constant 0 : i32
    return %arg0, %arg1 : i32, i32
  }
}

</mosaic_0001>

<llo_original>
// kernel: _lambda_.5
$region0: #{_lambda_.5}
  #allocation0 [shape = 'u32[]', space=smem, size = 0x4, offset = 0x4, fixed_abs, tag = 'smem constant byte address 0x4 - core index']
  #allocation1 [shape = 'u32[144,128]{1,0:T(1,128)}', space=vmem, size = 0x12000, scoped, tag = 'internal scratch']
  %s0 = inlined_call_operand.vmem [shape: bf16[64,128], index: 0, kind: input, shape index: {}]
  %s1 = inlined_call_operand.vmem [shape: bf16[128,128], index: 1, kind: input, shape index: {}]
  %s2 = inlined_call_operand.vmem [shape: f32[1,128], index: 2, kind: input, shape index: {}]
  %s3 = inlined_call_operand.vmem [shape: f32[64,128], index: 3, kind: output, shape index: {}]
  %s4 = sld [smem:[#allocation0]]
  $region22: #{_lambda_.5} parent=0
    _
  %s6 = ssub.s32 1, %s4
  %s7 = scalar_select 0, %s6, %s4
  // Predicated region
  $region2: #{_lambda_.5} parent=0 // pred_check
    _
  $region3: #{_lambda_.5} parent=0 // pred_check_branch
    %9 = sbr.rel (0) target = $region5
  $region4: #{_lambda_.5} parent=0 // pred_region
    _
  $region5: #{_lambda_.5} parent=0 // pred_fallthru
    _
  // Predicated region
  $region6: #{_lambda_.5} parent=0 // pred_check
    _
  $region7: #{_lambda_.5} parent=0 // pred_check_branch
    %11 = sbr.rel (0) target = $region9
  $region8: #{_lambda_.5} parent=0 // pred_region
    _
  $region9: #{_lambda_.5} parent=0 // pred_fallthru
    _
  // Predicated region
  $region10: #{_lambda_.5} parent=0 // pred_check
    _
  $region11: #{_lambda_.5} parent=0 // pred_check_branch
    %13 = sbr.rel (0) target = $region13
  $region12: #{_lambda_.5} parent=0 // pred_region
    _
  $region13: #{_lambda_.5} parent=0 // pred_fallthru
    _
  %v15 = vld [vmem:[%s0] sm:$0xf]
  %v16 = vld [vmem:[%s0 + $0x4] sm:$0xf]
  %v17 = vld [vmem:[%s0 + $0x8] sm:$0xf]
  %v18 = vld [vmem:[%s0 + $0xc] sm:$0xf]
  %v19 = vld [vmem:[%s0 + $0x10] sm:$0xf]
  %v20 = vld [vmem:[%s0 + $0x14] sm:$0xf]
  %v21 = vld [vmem:[%s0 + $0x18] sm:$0xf]
  %v22 = vld [vmem:[%s0 + $0x1c] sm:$0xf]
  %v23 = vld [vmem:[%s1] sm:$0xf]
  %v24 = vld [vmem:[%s1 + $0x4] sm:$0xf]
  %v25 = vld [vmem:[%s1 + $0x8] sm:$0xf]
  %v26 = vld [vmem:[%s1 + $0xc] sm:$0xf]
  %v27 = vld [vmem:[%s1 + $0x10] sm:$0xf]
  %v28 = vld [vmem:[%s1 + $0x14] sm:$0xf]
  %v29 = vld [vmem:[%s1 + $0x18] sm:$0xf]
  %v30 = vld [vmem:[%s1 + $0x1c] sm:$0xf]
  %v31 = vld [vmem:[%s1 + $0x20] sm:$0xf]
  %v32 = vld [vmem:[%s1 + $0x24] sm:$0xf]
  %v33 = vld [vmem:[%s1 + $0x28] sm:$0xf]
  %v34 = vld [vmem:[%s1 + $0x2c] sm:$0xf]
  %v35 = vld [vmem:[%s1 + $0x30] sm:$0xf]
  %v36 = vld [vmem:[%s1 + $0x34] sm:$0xf]
  %v37 = vld [vmem:[%s1 + $0x38] sm:$0xf]
  %v38 = vld [vmem:[%s1 + $0x3c] sm:$0xf]
  %v39 = vld [vmem:[%s2] sm:$0x1]
  %v41 = vlaneseq
  %v42 = vshrl.u32 %v41, 7
  %v43 = vsub.s32 0, %v42
  %v44 = vrot.slane %v39, %v43
  %v54 = vunpack.c.l.b16 %v15
  %v55 = vunpack.c.l.b16 %v16
  %v56 = vunpack.c.l.b16 %v17
  %v57 = vunpack.c.l.b16 %v18
  %v58 = vunpack.c.l.b16 %v19
  %v59 = vunpack.c.l.b16 %v20
  %v60 = vunpack.c.l.b16 %v21
  %v61 = vunpack.c.l.b16 %v22
  %v62 = vpack.c.b16 %v55, %v54
  %v63 = vpack.c.b16 %v57, %v56
  %v64 = vpack.c.b16 %v59, %v58
  %v65 = vpack.c.b16 %v61, %v60
  %v86 = vunpack.c.l.b16 %v23
  %v87 = vunpack.c.l.b16 %v24
  %v88 = vunpack.c.l.b16 %v25
  %v89 = vunpack.c.l.b16 %v26
  %v90 = vunpack.c.l.b16 %v27
  %v91 = vunpack.c.l.b16 %v28
  %v92 = vunpack.c.l.b16 %v29
  %v93 = vunpack.c.l.b16 %v30
  %v94 = vunpack.c.l.b16 %v31
  %v95 = vunpack.c.l.b16 %v32
  %v96 = vunpack.c.l.b16 %v33
  %v97 = vunpack.c.l.b16 %v34
  %v98 = vunpack.c.l.b16 %v35
  %v99 = vunpack.c.l.b16 %v36
  %v100 = vunpack.c.l.b16 %v37
  %v101 = vunpack.c.l.b16 %v38
  %v102 = vpack.c.b16 %v87, %v86
  %v103 = vpack.c.b16 %v89, %v88
  %v104 = vpack.c.b16 %v91, %v90
  %v105 = vpack.c.b16 %v93, %v92
  %v106 = vpack.c.b16 %v95, %v94
  %v107 = vpack.c.b16 %v97, %v96
  %v108 = vpack.c.b16 %v99, %v98
  %v109 = vpack.c.b16 %v101, %v100
  %118 = vmatprep.subr.bf16.mxu0 0
  %119 = vmatpush1.bf16.msra.mxu0 %v109
  %120 = vmatprep.subr.bf16.mxu0 0
  %121 = vmatpush1.bf16.msra.mxu0 %v108
  %122 = vmatprep.subr.bf16.mxu0 0
  %123 = vmatpush1.bf16.msra.mxu0 %v107
  %124 = vmatprep.subr.bf16.mxu0 0
  %125 = vmatpush1.bf16.msra.mxu0 %v106
  %126 = vmatprep.subr.bf16.mxu0 0
  %127 = vmatpush1.bf16.msra.mxu0 %v105
  %128 = vmatprep.subr.bf16.mxu0 0
  %129 = vmatpush1.bf16.msra.mxu0 %v104
  %130 = vmatprep.subr.bf16.mxu0 0
  %131 = vmatpush1.bf16.msra.mxu0 %v103
  %132 = vmatprep.subr.bf16.mxu0 0
  %133 = vmatpush1.bf16.msra.mxu0 %v102
  %134 = vmatprep.subr.bf16.mxu0 0
  %135 = vmatpush2.bf16.msra.mxu0 0
  %136 = vmatprep.subr.bf16.mxu0 0
  %137 = vmatpush2.bf16.msra.mxu0 0
  %138 = vmatprep.subr.bf16.mxu0 0
  %139 = vmatpush2.bf16.msra.mxu0 0
  %140 = vmatprep.subr.bf16.mxu0 0
  %141 = vmatpush2.bf16.msra.mxu0 0
  %142 = vmatprep.subr.bf16.mxu0 0
  %143 = vmatpush2.bf16.msra.mxu0 0
  %144 = vmatprep.subr.bf16.mxu0 0
  %145 = vmatpush2.bf16.msra.mxu0 0
  %146 = vmatprep.subr.bf16.mxu0 0
  %147 = vmatpush2.bf16.msra.mxu0 0
  %148 = vmatprep.subr.bf16.mxu0 0
  %149 = vmatpush2.bf16.msra.mxu0 0
  %150 = vmatprep.mubr.bf16.mxu0 0
  %151 = vmatmul.mubr.bf16.gmra.mxu0 %v62
  %v152 = vpop.f32.mrf.mxu0
  %v153 = vadd.f32 %v44, %v152
  %v154 = vpop.f32.mrf.mxu0
  %v155 = vpop.f32.mrf.mxu0
  %v156 = vadd.f32 %v44, %v155
  %v157 = vpop.f32.mrf.mxu0
  %158 = vmatprep.mubr.bf16.mxu0 0
  %159 = vmatmul.mubr.bf16.gmra.mxu0 %v63
  %v160 = vpop.f32.mrf.mxu0
  %v161 = vadd.f32 %v44, %v160
  %v162 = vpop.f32.mrf.mxu0
  %v163 = vpop.f32.mrf.mxu0
  %v164 = vadd.f32 %v44, %v163
  %v165 = vpop.f32.mrf.mxu0
  %166 = vmatprep.mubr.bf16.mxu0 0
  %167 = vmatmul.mubr.bf16.gmra.mxu0 %v64
  %v168 = vpop.f32.mrf.mxu0
  %v169 = vadd.f32 %v44, %v168
  %v170 = vpop.f32.mrf.mxu0
  %v171 = vpop.f32.mrf.mxu0
  %v172 = vadd.f32 %v44, %v171
  %v173 = vpop.f32.mrf.mxu0
  %174 = vmatprep.mubr.bf16.mxu0 0
  %175 = vmatmul.mubr.bf16.gmra.mxu0 %v65
  %v176 = vpop.f32.mrf.mxu0
  %v177 = vadd.f32 %v44, %v176
  %v178 = vpop.f32.mrf.mxu0
  %v179 = vpop.f32.mrf.mxu0
  %v180 = vadd.f32 %v44, %v179
  %v181 = vpop.f32.mrf.mxu0
  %182 = vdwg.mxu0
  %183 = vst [vmem:[%s3] sm:$0xff] %v153
  %184 = vst [vmem:[%s3 + $0x8] sm:$0xff] %v156
  %185 = vst [vmem:[%s3 + $0x10] sm:$0xff] %v161
  %186 = vst [vmem:[%s3 + $0x18] sm:$0xff] %v164
  %187 = vst [vmem:[%s3 + $0x20] sm:$0xff] %v169
  %188 = vst [vmem:[%s3 + $0x28] sm:$0xff] %v172
  %189 = vst [vmem:[%s3 + $0x30] sm:$0xff] %v177
  %190 = vst [vmem:[%s3 + $0x38] sm:$0xff] %v180
  // Predicated region
  $region14: #{_lambda_.5} parent=0 // pred_check
    _
  $region15: #{_lambda_.5} parent=0 // pred_check_branch
    %192 = sbr.rel (0) target = $region17
  $region16: #{_lambda_.5} parent=0 // pred_region
    _
  $region17: #{_lambda_.5} parent=0 // pred_fallthru
    _
  // Predicated region
  $region18: #{_lambda_.5} parent=0 // pred_check
    _
  $region19: #{_lambda_.5} parent=0 // pred_check_branch
    %194 = sbr.rel (0) target = $region21
  $region20: #{_lambda_.5} parent=0 // pred_region
    _
  $region21: #{_lambda_.5} parent=0 // pred_fallthru
    _

// kernel: _lambda_.3
$region0: #{_lambda_.3}
  #allocation0 [shape = 'u32[]', space=smem, size = 0x4, offset = 0x4, fixed_abs, tag = 'smem constant byte address 0x4 - core index']
  #allocation1 [shape = 'u32[144,128]{1,0:T(1,128)}', space=vmem, size = 0x12000, scoped, tag = 'internal scratch']
  %s0 = inlined_call_operand.vmem [shape: bf16[64,128], index: 0, kind: input, shape index: {}]
  %s1 = inlined_call_operand.hbm [shape: bf16[128,512], index: 1, kind: input, shape index: {}]
  %s2 = inlined_call_operand.vmem [shape: f32[1,512], index: 2, kind: input, shape index: {}]
  %s3 = inlined_call_operand.vmem [shape: f32[64,512], index: 3, kind: output, shape index: {}]
  %s4 = sld [smem:[#allocation0]]
  $region26: #{_lambda_.3} parent=0
    _
  %s6 = ssub.s32 1, %s4
  %s7 = scalar_select 0, %s6, %s4
  $region1: #{_lambda_.3} parent=0
    #allocation2 [shape = 'u8[131072]{0}', space=vmem, size = 0x20000, scoped, tag = 'input window, operand 1, single buffered']
    #allocation3 [shape = 's32[1]{0}', space=sflag, size = 0x4, scoped, tag = 'scoped memory for _lambda_.3']
    %8 = vsyncpa [#allocation3], 0
    // Predicated region
    $region2: #{_lambda_.3} parent=1 // pred_check
      _
    $region3: #{_lambda_.3} parent=1 // pred_check_branch
      %10 = sbr.rel (0) target = $region5
    $region4: #{_lambda_.3} parent=1 // pred_region
      _
    $region5: #{_lambda_.3} parent=1 // pred_fallthru
      _
    // Predicated region
    $region6: #{_lambda_.3} parent=1 // pred_check
      _
    $region7: #{_lambda_.3} parent=1 // pred_check_branch
      %12 = sbr.rel (0) target = $region9
    $region8: #{_lambda_.3} parent=1 // pred_region
      %s14 = ssub.s32 4096, 4096
      %15 = vsyncadd [#allocation3], %s14
      %s16 = sshll.u32 [#allocation2], 4
      %s17 = int_to_ptr.vmem [resolvable:$true] %s16
      %22 = dma.hbm_to_vmem [thread:$0]  %s1, 4096, %s17, [#allocation3], 256, 256, 16
    $region9: #{_lambda_.3} parent=1 // pred_fallthru
      _
    // Predicated region
    $region10: #{_lambda_.3} parent=1 // pred_check
      _
    $region11: #{_lambda_.3} parent=1 // pred_check_branch
      %24 = sbr.rel (0) target = $region13
    $region12: #{_lambda_.3} parent=1 // pred_region
      _
    $region13: #{_lambda_.3} parent=1 // pred_fallthru
      _
    // Predicated region
    $region14: #{_lambda_.3} parent=1 // pred_check
      _
    $region15: #{_lambda_.3} parent=1 // pred_check_branch
      %26 = sbr.rel (0) target = $region17
    $region16: #{_lambda_.3} parent=1 // pred_region
      %27 = dma.done [#allocation3], 4096
    $region17: #{_lambda_.3} parent=1 // pred_fallthru
      _
    %v29 = vld [vmem:[%s0] sm:$0xf]
    %v30 = vld [vmem:[%s0 + $0x4] sm:$0xf]
    %v31 = vld [vmem:[%s0 + $0x8] sm:$0xf]
    %v32 = vld [vmem:[%s0 + $0xc] sm:$0xf]
    %v33 = vld [vmem:[%s0 + $0x10] sm:$0xf]
    %v34 = vld [vmem:[%s0 + $0x14] sm:$0xf]
    %v35 = vld [vmem:[%s0 + $0x18] sm:$0xf]
    %v36 = vld [vmem:[%s0 + $0x1c] sm:$0xf]
    %v37 = vld [vmem:[#allocation2] sm:$0xff]
    %v38 = vld [vmem:[#allocation2 + $0x8] sm:$0xff]
    %v39 = vld [vmem:[#allocation2 + $0x10] sm:$0xff]
    %v40 = vld [vmem:[#allocation2 + $0x18] sm:$0xff]
    %v41 = vld [vmem:[#allocation2 + $0x20] sm:$0xff]
    %v42 = vld [vmem:[#allocation2 + $0x28] sm:$0xff]
    %v43 = vld [vmem:[#allocation2 + $0x30] sm:$0xff]
    %v44 = vld [vmem:[#allocation2 + $0x38] sm:$0xff]
    %v45 = vld [vmem:[#allocation2 + $0x40] sm:$0xff]
    %v46 = vld [vmem:[#allocation2 + $0x48] sm:$0xff]
    %v47 = vld [vmem:[#allocation2 + $0x50] sm:$0xff]
    %v48 = vld [vmem:[#allocation2 + $0x58] sm:$0xff]
    %v49 = vld [vmem:[#allocation2 + $0x60] sm:$0xff]
    %v50 = vld [vmem:[#allocation2 + $0x68] sm:$0xff]
    %v51 = vld [vmem:[#allocation2 + $0x70] sm:$0xff]
    %v52 = vld [vmem:[#allocation2 + $0x78] sm:$0xff]
    %v53 = vld [vmem:[#allocation2 + $0x80] sm:$0xff]
    %v54 = vld [vmem:[#allocation2 + $0x88] sm:$0xff]
    %v55 = vld [vmem:[#allocation2 + $0x90] sm:$0xff]
    %v56 = vld [vmem:[#allocation2 + $0x98] sm:$0xff]
    %v57 = vld [vmem:[#allocation2 + $0xa0] sm:$0xff]
    %v58 = vld [vmem:[#allocation2 + $0xa8] sm:$0xff]
    %v59 = vld [vmem:[#allocation2 + $0xb0] sm:$0xff]
    %v60 = vld [vmem:[#allocation2 + $0xb8] sm:$0xff]
    %v61 = vld [vmem:[#allocation2 + $0xc0] sm:$0xff]
    %v62 = vld [vmem:[#allocation2 + $0xc8] sm:$0xff]
    %v63 = vld [vmem:[#allocation2 + $0xd0] sm:$0xff]
    %v64 = vld [vmem:[#allocation2 + $0xd8] sm:$0xff]
    %v65 = vld [vmem:[#allocation2 + $0xe0] sm:$0xff]
    %v66 = vld [vmem:[#allocation2 + $0xe8] sm:$0xff]
    %v67 = vld [vmem:[#allocation2 + $0xf0] sm:$0xff]
    %v68 = vld [vmem:[#allocation2 + $0xf8] sm:$0xff]
    %v69 = vld [vmem:[%s2] sm:$0xf]
    %v71 = vlaneseq
    %v72 = vshrl.u32 %v71, 7
    %v73 = vsub.s32 0, %v72
    %v74 = vrot.slane %v69, %v73
    %v75 = vlaneseq
    %v76 = vshrl.u32 %v75, 7
    %v77 = vsub.s32 1, %v76
    %v78 = vrot.slane %v69, %v77
    %v79 = vlaneseq
    %v80 = vshrl.u32 %v79, 7
    %v81 = vsub.s32 2, %v80
    %v82 = vrot.slane %v69, %v81
    %v83 = vlaneseq
    %v84 = vshrl.u32 %v83, 7
    %v85 = vsub.s32 3, %v84
    %v86 = vrot.slane %v69, %v85
    %v99 = vunpack.c.l.b16 %v29
    %v100 = vunpack.c.l.b16 %v30
    %v101 = vunpack.c.l.b16 %v31
    %v102 = vunpack.c.l.b16 %v32
    %v103 = vunpack.c.l.b16 %v33
    %v104 = vunpack.c.l.b16 %v34
    %v105 = vunpack.c.l.b16 %v35
    %v106 = vunpack.c.l.b16 %v36
    %v107 = vpack.c.b16 %v100, %v99
    %v108 = vpack.c.b16 %v102, %v101
    %v109 = vpack.c.b16 %v104, %v103
    %v110 = vpack.c.b16 %v106, %v105
    %v147 = vunpack.c.l.b16 %v37
    %v148 = vunpack.c.h.b16 %v37
    %v149 = vunpack.c.l.b16 %v38
    %v150 = vunpack.c.h.b16 %v38
    %v151 = vunpack.c.l.b16 %v39
    %v152 = vunpack.c.h.b16 %v39
    %v153 = vunpack.c.l.b16 %v40
    %v154 = vunpack.c.h.b16 %v40
    %v155 = vunpack.c.l.b16 %v41
    %v156 = vunpack.c.h.b16 %v41
    %v157 = vunpack.c.l.b16 %v42
    %v158 = vunpack.c.h.b16 %v42
    %v159 = vunpack.c.l.b16 %v43
    %v160 = vunpack.c.h.b16 %v43
    %v161 = vunpack.c.l.b16 %v44
    %v162 = vunpack.c.h.b16 %v44
    %v163 = vunpack.c.l.b16 %v45
    %v164 = vunpack.c.h.b16 %v45
    %v165 = vunpack.c.l.b16 %v46
    %v166 = vunpack.c.h.b16 %v46
    %v167 = vunpack.c.l.b16 %v47
    %v168 = vunpack.c.h.b16 %v47
    %v169 = vunpack.c.l.b16 %v48
    %v170 = vunpack.c.h.b16 %v48
    %v171 = vunpack.c.l.b16 %v49
    %v172 = vunpack.c.h.b16 %v49
    %v173 = vunpack.c.l.b16 %v50
    %v174 = vunpack.c.h.b16 %v50
    %v175 = vunpack.c.l.b16 %v51
    %v176 = vunpack.c.h.b16 %v51
    %v177 = vunpack.c.l.b16 %v52
    %v178 = vunpack.c.h.b16 %v52
    %v179 = vunpack.c.l.b16 %v53
    %v180 = vunpack.c.h.b16 %v53
    %v181 = vunpack.c.l.b16 %v54
    %v182 = vunpack.c.h.b16 %v54
    %v183 = vunpack.c.l.b16 %v55
    %v184 = vunpack.c.h.b16 %v55
    %v185 = vunpack.c.l.b16 %v56
    %v186 = vunpack.c.h.b16 %v56
    %v187 = vunpack.c.l.b16 %v57
    %v188 = vunpack.c.h.b16 %v57
    %v189 = vunpack.c.l.b16 %v58
    %v190 = vunpack.c.h.b16 %v58
    %v191 = vunpack.c.l.b16 %v59
    %v192 = vunpack.c.h.b16 %v59
    %v193 = vunpack.c.l.b16 %v60
    %v194 = vunpack.c.h.b16 %v60
    %v195 = vunpack.c.l.b16 %v61
    %v196 = vunpack.c.h.b16 %v61
    %v197 = vunpack.c.l.b16 %v62
    %v198 = vunpack.c.h.b16 %v62
    %v199 = vunpack.c.l.b16 %v63
    %v200 = vunpack.c.h.b16 %v63
    %v201 = vunpack.c.l.b16 %v64
    %v202 = vunpack.c.h.b16 %v64
    %v203 = vunpack.c.l.b16 %v65
    %v204 = vunpack.c.h.b16 %v65
    %v205 = vunpack.c.l.b16 %v66
    %v206 = vunpack.c.h.b16 %v66
    %v207 = vunpack.c.l.b16 %v67
    %v208 = vunpack.c.h.b16 %v67
    %v209 = vunpack.c.l.b16 %v68
    %v210 = vunpack.c.h.b16 %v68
    %v211 = vpack.c.b16 %v151, %v147
    %v212 = vpack.c.b16 %v152, %v148
    %v213 = vpack.c.b16 %v153, %v149
    %v214 = vpack.c.b16 %v154, %v150
    %v215 = vpack.c.b16 %v159, %v155
    %v216 = vpack.c.b16 %v160, %v156
    %v217 = vpack.c.b16 %v161, %v157
    %v218 = vpack.c.b16 %v162, %v158
    %v219 = vpack.c.b16 %v167, %v163
    %v220 = vpack.c.b16 %v168, %v164
    %v221 = vpack.c.b16 %v169, %v165
    %v222 = vpack.c.b16 %v170, %v166
    %v223 = vpack.c.b16 %v175, %v171
    %v224 = vpack.c.b16 %v176, %v172
    %v225 = vpack.c.b16 %v177, %v173
    %v226 = vpack.c.b16 %v178, %v174
    %v227 = vpack.c.b16 %v183, %v179
    %v228 = vpack.c.b16 %v184, %v180
    %v229 = vpack.c.b16 %v185, %v181
    %v230 = vpack.c.b16 %v186, %v182
    %v231 = vpack.c.b16 %v191, %v187
    %v232 = vpack.c.b16 %v192, %v188
    %v233 = vpack.c.b16 %v193, %v189
    %v234 = vpack.c.b16 %v194, %v190
    %v235 = vpack.c.b16 %v199, %v195
    %v236 = vpack.c.b16 %v200, %v196
    %v237 = vpack.c.b16 %v201, %v197
    %v238 = vpack.c.b16 %v202, %v198
    %v239 = vpack.c.b16 %v207, %v203
    %v240 = vpack.c.b16 %v208, %v204
    %v241 = vpack.c.b16 %v209, %v205
    %v242 = vpack.c.b16 %v210, %v206
    %275 = vmatprep.subr.bf16.mxu0 %v240
    %276 = vmatpush1.bf16.msra.mxu0 %v239
    %277 = vmatprep.subr.bf16.mxu0 %v236
    %278 = vmatpush1.bf16.msra.mxu0 %v235
    %279 = vmatprep.subr.bf16.mxu0 %v232
    %280 = vmatpush1.bf16.msra.mxu0 %v231
    %281 = vmatprep.subr.bf16.mxu0 %v228
    %282 = vmatpush1.bf16.msra.mxu0 %v227
    %283 = vmatprep.subr.bf16.mxu0 %v224
    %284 = vmatpush1.bf16.msra.mxu0 %v223
    %285 = vmatprep.subr.bf16.mxu0 %v220
    %286 = vmatpush1.bf16.msra.mxu0 %v219
    %287 = vmatprep.subr.bf16.mxu0 %v216
    %288 = vmatpush1.bf16.msra.mxu0 %v215
    %289 = vmatprep.subr.bf16.mxu0 %v212
    %290 = vmatpush1.bf16.msra.mxu0 %v211
    %291 = vmatprep.subr.bf16.mxu0 0
    %292 = vmatpush2.bf16.msra.mxu0 0
    %293 = vmatprep.subr.bf16.mxu0 0
    %294 = vmatpush2.bf16.msra.mxu0 0
    %295 = vmatprep.subr.bf16.mxu0 0
    %296 = vmatpush2.bf16.msra.mxu0 0
    %297 = vmatprep.subr.bf16.mxu0 0
    %298 = vmatpush2.bf16.msra.mxu0 0
    %299 = vmatprep.subr.bf16.mxu0 0
    %300 = vmatpush2.bf16.msra.mxu0 0
    %301 = vmatprep.subr.bf16.mxu0 0
    %302 = vmatpush2.bf16.msra.mxu0 0
    %303 = vmatprep.subr.bf16.mxu0 0
    %304 = vmatpush2.bf16.msra.mxu0 0
    %305 = vmatprep.subr.bf16.mxu0 0
    %306 = vmatpush2.bf16.msra.mxu0 0
    %307 = vmatprep.mubr.bf16.mxu0 0
    %308 = vmatmul.mubr.bf16.gmra.mxu0 %v107
    %v309 = vpop.f32.mrf.mxu0
    %v310 = vadd.f32 %v74, %v309
    %v311 = vpop.f32.mrf.mxu0
    %v312 = vadd.f32 %v78, %v311
    %v313 = vpop.f32.mrf.mxu0
    %v314 = vadd.f32 %v74, %v313
    %v315 = vpop.f32.mrf.mxu0
    %v316 = vadd.f32 %v78, %v315
    %317 = vmatprep.mubr.bf16.mxu0 0
    %318 = vmatmul.mubr.bf16.gmra.mxu0 %v108
    %v319 = vpop.f32.mrf.mxu0
    %v320 = vadd.f32 %v74, %v319
    %v321 = vpop.f32.mrf.mxu0
    %v322 = vadd.f32 %v78, %v321
    %v323 = vpop.f32.mrf.mxu0
    %v324 = vadd.f32 %v74, %v323
    %v325 = vpop.f32.mrf.mxu0
    %v326 = vadd.f32 %v78, %v325
    %327 = vmatprep.mubr.bf16.mxu0 0
    %328 = vmatmul.mubr.bf16.gmra.mxu0 %v109
    %v329 = vpop.f32.mrf.mxu0
    %v330 = vadd.f32 %v74, %v329
    %v331 = vpop.f32.mrf.mxu0
    %v332 = vadd.f32 %v78, %v331
    %v333 = vpop.f32.mrf.mxu0
    %v334 = vadd.f32 %v74, %v333
    %v335 = vpop.f32.mrf.mxu0
    %v336 = vadd.f32 %v78, %v335
    %337 = vmatprep.mubr.bf16.mxu0 0
    %338 = vmatmul.mubr.bf16.gmra.mxu0 %v110
    %v339 = vpop.f32.mrf.mxu0
    %v340 = vadd.f32 %v74, %v339
    %v341 = vpop.f32.mrf.mxu0
    %v342 = vadd.f32 %v78, %v341
    %v343 = vpop.f32.mrf.mxu0
    %v344 = vadd.f32 %v74, %v343
    %v345 = vpop.f32.mrf.mxu0
    %v346 = vadd.f32 %v78, %v345
    %347 = vdwg.mxu0
    %348 = vmatprep.subr.bf16.mxu0 %v242
    %349 = vmatpush1.bf16.msra.mxu0 %v241
    %350 = vmatprep.subr.bf16.mxu0 %v238
    %351 = vmatpush1.bf16.msra.mxu0 %v237
    %352 = vmatprep.subr.bf16.mxu0 %v234
    %353 = vmatpush1.bf16.msra.mxu0 %v233
    %354 = vmatprep.subr.bf16.mxu0 %v230
    %355 = vmatpush1.bf16.msra.mxu0 %v229
    %356 = vmatprep.subr.bf16.mxu0 %v226
    %357 = vmatpush1.bf16.msra.mxu0 %v225
    %358 = vmatprep.subr.bf16.mxu0 %v222
    %359 = vmatpush1.bf16.msra.mxu0 %v221
    %360 = vmatprep.subr.bf16.mxu0 %v218
    %361 = vmatpush1.bf16.msra.mxu0 %v217
    %362 = vmatprep.subr.bf16.mxu0 %v214
    %363 = vmatpush1.bf16.msra.mxu0 %v213
    %364 = vmatprep.subr.bf16.mxu0 0
    %365 = vmatpush2.bf16.msra.mxu0 0
    %366 = vmatprep.subr.bf16.mxu0 0
    %367 = vmatpush2.bf16.msra.mxu0 0
    %368 = vmatprep.subr.bf16.mxu0 0
    %369 = vmatpush2.bf16.msra.mxu0 0
    %370 = vmatprep.subr.bf16.mxu0 0
    %371 = vmatpush2.bf16.msra.mxu0 0
    %372 = vmatprep.subr.bf16.mxu0 0
    %373 = vmatpush2.bf16.msra.mxu0 0
    %374 = vmatprep.subr.bf16.mxu0 0
    %375 = vmatpush2.bf16.msra.mxu0 0
    %376 = vmatprep.subr.bf16.mxu0 0
    %377 = vmatpush2.bf16.msra.mxu0 0
    %378 = vmatprep.subr.bf16.mxu0 0
    %379 = vmatpush2.bf16.msra.mxu0 0
    %380 = vmatprep.mubr.bf16.mxu0 0
    %381 = vmatmul.mubr.bf16.gmra.mxu0 %v107
    %v382 = vpop.f32.mrf.mxu0
    %v383 = vadd.f32 %v82, %v382
    %v384 = vpop.f32.mrf.mxu0
    %v385 = vadd.f32 %v86, %v384
    %v386 = vpop.f32.mrf.mxu0
    %v387 = vadd.f32 %v82, %v386
    %v388 = vpop.f32.mrf.mxu0
    %v389 = vadd.f32 %v86, %v388
    %390 = vmatprep.mubr.bf16.mxu0 0
    %391 = vmatmul.mubr.bf16.gmra.mxu0 %v108
    %v392 = vpop.f32.mrf.mxu0
    %v393 = vadd.f32 %v82, %v392
    %v394 = vpop.f32.mrf.mxu0
    %v395 = vadd.f32 %v86, %v394
    %v396 = vpop.f32.mrf.mxu0
    %v397 = vadd.f32 %v82, %v396
    %v398 = vpop.f32.mrf.mxu0
    %v399 = vadd.f32 %v86, %v398
    %400 = vmatprep.mubr.bf16.mxu0 0
    %401 = vmatmul.mubr.bf16.gmra.mxu0 %v109
    %v402 = vpop.f32.mrf.mxu0
    %v403 = vadd.f32 %v82, %v402
    %v404 = vpop.f32.mrf.mxu0
    %v405 = vadd.f32 %v86, %v404
    %v406 = vpop.f32.mrf.mxu0
    %v407 = vadd.f32 %v82, %v406
    %v408 = vpop.f32.mrf.mxu0
    %v409 = vadd.f32 %v86, %v408
    %410 = vmatprep.mubr.bf16.mxu0 0
    %411 = vmatmul.mubr.bf16.gmra.mxu0 %v110
    %v412 = vpop.f32.mrf.mxu0
    %v413 = vadd.f32 %v82, %v412
    %v414 = vpop.f32.mrf.mxu0
    %v415 = vadd.f32 %v86, %v414
    %v416 = vpop.f32.mrf.mxu0
    %v417 = vadd.f32 %v82, %v416
    %v418 = vpop.f32.mrf.mxu0
    %v419 = vadd.f32 %v86, %v418
    %420 = vdwg.mxu0
    %421 = vst [vmem:[%s3] sm:$0xff] %v310
    %422 = vst [vmem:[%s3 + $0x8] sm:$0xff] %v312
    %423 = vst [vmem:[%s3 + $0x10] sm:$0xff] %v383
    %424 = vst [vmem:[%s3 + $0x18] sm:$0xff] %v385
    %425 = vst [vmem:[%s3 + $0x20] sm:$0xff] %v314
    %426 = vst [vmem:[%s3 + $0x28] sm:$0xff] %v316
    %427 = vst [vmem:[%s3 + $0x30] sm:$0xff] %v387
    %428 = vst [vmem:[%s3 + $0x38] sm:$0xff] %v389
    %429 = vst [vmem:[%s3 + $0x40] sm:$0xff] %v320
    %430 = vst [vmem:[%s3 + $0x48] sm:$0xff] %v322
    %431 = vst [vmem:[%s3 + $0x50] sm:$0xff] %v393
    %432 = vst [vmem:[%s3 + $0x58] sm:$0xff] %v395
    %433 = vst [vmem:[%s3 + $0x60] sm:$0xff] %v324
    %434 = vst [vmem:[%s3 + $0x68] sm:$0xff] %v326
    %435 = vst [vmem:[%s3 + $0x70] sm:$0xff] %v397
    %436 = vst [vmem:[%s3 + $0x78] sm:$0xff] %v399
    %437 = vst [vmem:[%s3 + $0x80] sm:$0xff] %v330
    %438 = vst [vmem:[%s3 + $0x88] sm:$0xff] %v332
    %439 = vst [vmem:[%s3 + $0x90] sm:$0xff] %v403
    %440 = vst [vmem:[%s3 + $0x98] sm:$0xff] %v405
    %441 = vst [vmem:[%s3 + $0xa0] sm:$0xff] %v334
    %442 = vst [vmem:[%s3 + $0xa8] sm:$0xff] %v336
    %443 = vst [vmem:[%s3 + $0xb0] sm:$0xff] %v407
    %444 = vst [vmem:[%s3 + $0xb8] sm:$0xff] %v409
    %445 = vst [vmem:[%s3 + $0xc0] sm:$0xff] %v340
    %446 = vst [vmem:[%s3 + $0xc8] sm:$0xff] %v342
    %447 = vst [vmem:[%s3 + $0xd0] sm:$0xff] %v413
    %448 = vst [vmem:[%s3 + $0xd8] sm:$0xff] %v415
    %449 = vst [vmem:[%s3 + $0xe0] sm:$0xff] %v344
    %450 = vst [vmem:[%s3 + $0xe8] sm:$0xff] %v346
    %451 = vst [vmem:[%s3 + $0xf0] sm:$0xff] %v417
    %452 = vst [vmem:[%s3 + $0xf8] sm:$0xff] %v419
    // Predicated region
    $region18: #{_lambda_.3} parent=1 // pred_check
      _
    $region19: #{_lambda_.3} parent=1 // pred_check_branch
      %454 = sbr.rel (0) target = $region21
    $region20: #{_lambda_.3} parent=1 // pred_region
      _
    $region21: #{_lambda_.3} parent=1 // pred_fallthru
      _
    // Predicated region
    $region22: #{_lambda_.3} parent=1 // pred_check
      _
    $region23: #{_lambda_.3} parent=1 // pred_check_branch
      %456 = sbr.rel (0) target = $region25
    $region24: #{_lambda_.3} parent=1 // pred_region
      _
    $region25: #{_lambda_.3} parent=1 // pred_fallthru
      _
    %457 = vsyncpa [#allocation3], 1

// kernel: _lambda_.4
$region0: #{_lambda_.4}
  #allocation0 [shape = 'u32[]', space=smem, size = 0x4, offset = 0x4, fixed_abs, tag = 'smem constant byte address 0x4 - core index']
  #allocation1 [shape = 'u32[144,128]{1,0:T(1,128)}', space=vmem, size = 0x12000, scoped, tag = 'internal scratch']
  %s0 = inlined_call_operand.vmem [shape: f32[8,8,512], index: 0, kind: input, shape index: {}]
  %s1 = inlined_call_operand.vmem [shape: bf16[128,512], index: 1, kind: input, shape index: {}]
  %s2 = inlined_call_operand.vmem [shape: bf16[8,8,128], index: 2, kind: output, shape index: {}]
  %s3 = sld [smem:[#allocation0]]
  $region18: #{_lambda_.4} parent=0
    _
  %s5 = ssub.s32 1, %s3
  %s6 = scalar_select 0, %s5, %s3
  // Predicated region
  $region2: #{_lambda_.4} parent=0 // pred_check
    _
  $region3: #{_lambda_.4} parent=0 // pred_check_branch
    %8 = sbr.rel (0) target = $region5
  $region4: #{_lambda_.4} parent=0 // pred_region
    _
  $region5: #{_lambda_.4} parent=0 // pred_fallthru
    _
  // Predicated region
  $region6: #{_lambda_.4} parent=0 // pred_check
    _
  $region7: #{_lambda_.4} parent=0 // pred_check_branch
    %10 = sbr.rel (0) target = $region9
  $region8: #{_lambda_.4} parent=0 // pred_region
    _
  $region9: #{_lambda_.4} parent=0 // pred_fallthru
    _
  %v12 = vld [vmem:[%s1] sm:$0xff]
  %v13 = vld [vmem:[%s1 + $0x8] sm:$0xff]
  %v14 = vld [vmem:[%s1 + $0x10] sm:$0xff]
  %v15 = vld [vmem:[%s1 + $0x18] sm:$0xff]
  %v16 = vld [vmem:[%s1 + $0x20] sm:$0xff]
  %v17 = vld [vmem:[%s1 + $0x28] sm:$0xff]
  %v18 = vld [vmem:[%s1 + $0x30] sm:$0xff]
  %v19 = vld [vmem:[%s1 + $0x38] sm:$0xff]
  %v20 = vld [vmem:[%s1 + $0x40] sm:$0xff]
  %v21 = vld [vmem:[%s1 + $0x48] sm:$0xff]
  %v22 = vld [vmem:[%s1 + $0x50] sm:$0xff]
  %v23 = vld [vmem:[%s1 + $0x58] sm:$0xff]
  %v24 = vld [vmem:[%s1 + $0x60] sm:$0xff]
  %v25 = vld [vmem:[%s1 + $0x68] sm:$0xff]
  %v26 = vld [vmem:[%s1 + $0x70] sm:$0xff]
  %v27 = vld [vmem:[%s1 + $0x78] sm:$0xff]
  %v28 = vld [vmem:[%s1 + $0x80] sm:$0xff]
  %v29 = vld [vmem:[%s1 + $0x88] sm:$0xff]
  %v30 = vld [vmem:[%s1 + $0x90] sm:$0xff]
  %v31 = vld [vmem:[%s1 + $0x98] sm:$0xff]
  %v32 = vld [vmem:[%s1 + $0xa0] sm:$0xff]
  %v33 = vld [vmem:[%s1 + $0xa8] sm:$0xff]
  %v34 = vld [vmem:[%s1 + $0xb0] sm:$0xff]
  %v35 = vld [vmem:[%s1 + $0xb8] sm:$0xff]
  %v36 = vld [vmem:[%s1 + $0xc0] sm:$0xff]
  %v37 = vld [vmem:[%s1 + $0xc8] sm:$0xff]
  %v38 = vld [vmem:[%s1 + $0xd0] sm:$0xff]
  %v39 = vld [vmem:[%s1 + $0xd8] sm:$0xff]
  %v40 = vld [vmem:[%s1 + $0xe0] sm:$0xff]
  %v41 = vld [vmem:[%s1 + $0xe8] sm:$0xff]
  %v42 = vld [vmem:[%s1 + $0xf0] sm:$0xff]
  %v43 = vld [vmem:[%s1 + $0xf8] sm:$0xff]
  %v44 = vld [vmem:[%s0] sm:$0xff]
  %v45 = vld [vmem:[%s0 + $0x8] sm:$0xff]
  %v46 = vld [vmem:[%s0 + $0x10] sm:$0xff]
  %v47 = vld [vmem:[%s0 + $0x18] sm:$0xff]
  %v80 = vunpack.c.l.b16 %v12
  %v81 = vunpack.c.h.b16 %v12
  %v82 = vunpack.c.l.b16 %v13
  %v83 = vunpack.c.h.b16 %v13
  %v84 = vunpack.c.l.b16 %v14
  %v85 = vunpack.c.h.b16 %v14
  %v86 = vunpack.c.l.b16 %v15
  %v87 = vunpack.c.h.b16 %v15
  %v88 = vunpack.c.l.b16 %v16
  %v89 = vunpack.c.h.b16 %v16
  %v90 = vunpack.c.l.b16 %v17
  %v91 = vunpack.c.h.b16 %v17
  %v92 = vunpack.c.l.b16 %v18
  %v93 = vunpack.c.h.b16 %v18
  %v94 = vunpack.c.l.b16 %v19
  %v95 = vunpack.c.h.b16 %v19
  %v96 = vunpack.c.l.b16 %v20
  %v97 = vunpack.c.h.b16 %v20
  %v98 = vunpack.c.l.b16 %v21
  %v99 = vunpack.c.h.b16 %v21
  %v100 = vunpack.c.l.b16 %v22
  %v101 = vunpack.c.h.b16 %v22
  %v102 = vunpack.c.l.b16 %v23
  %v103 = vunpack.c.h.b16 %v23
  %v104 = vunpack.c.l.b16 %v24
  %v105 = vunpack.c.h.b16 %v24
  %v106 = vunpack.c.l.b16 %v25
  %v107 = vunpack.c.h.b16 %v25
  %v108 = vunpack.c.l.b16 %v26
  %v109 = vunpack.c.h.b16 %v26
  %v110 = vunpack.c.l.b16 %v27
  %v111 = vunpack.c.h.b16 %v27
  %v112 = vunpack.c.l.b16 %v28
  %v113 = vunpack.c.h.b16 %v28
  %v114 = vunpack.c.l.b16 %v29
  %v115 = vunpack.c.h.b16 %v29
  %v116 = vunpack.c.l.b16 %v30
  %v117 = vunpack.c.h.b16 %v30
  %v118 = vunpack.c.l.b16 %v31
  %v119 = vunpack.c.h.b16 %v31
  %v120 = vunpack.c.l.b16 %v32
  %v121 = vunpack.c.h.b16 %v32
  %v122 = vunpack.c.l.b16 %v33
  %v123 = vunpack.c.h.b16 %v33
  %v124 = vunpack.c.l.b16 %v34
  %v125 = vunpack.c.h.b16 %v34
  %v126 = vunpack.c.l.b16 %v35
  %v127 = vunpack.c.h.b16 %v35
  %v128 = vunpack.c.l.b16 %v36
  %v129 = vunpack.c.h.b16 %v36
  %v130 = vunpack.c.l.b16 %v37
  %v131 = vunpack.c.h.b16 %v37
  %v132 = vunpack.c.l.b16 %v38
  %v133 = vunpack.c.h.b16 %v38
  %v134 = vunpack.c.l.b16 %v39
  %v135 = vunpack.c.h.b16 %v39
  %v136 = vunpack.c.l.b16 %v40
  %v137 = vunpack.c.h.b16 %v40
  %v138 = vunpack.c.l.b16 %v41
  %v139 = vunpack.c.h.b16 %v41
  %v140 = vunpack.c.l.b16 %v42
  %v141 = vunpack.c.h.b16 %v42
  %v142 = vunpack.c.l.b16 %v43
  %v143 = vunpack.c.h.b16 %v43
  %v144 = vpack.c.b16 %v84, %v80
  %v145 = vpack.c.b16 %v85, %v81
  %v146 = vpack.c.b16 %v86, %v82
  %v147 = vpack.c.b16 %v87, %v83
  %v148 = vpack.c.b16 %v92, %v88
  %v149 = vpack.c.b16 %v93, %v89
  %v150 = vpack.c.b16 %v94, %v90
  %v151 = vpack.c.b16 %v95, %v91
  %v152 = vpack.c.b16 %v100, %v96
  %v153 = vpack.c.b16 %v101, %v97
  %v154 = vpack.c.b16 %v102, %v98
  %v155 = vpack.c.b16 %v103, %v99
  %v156 = vpack.c.b16 %v108, %v104
  %v157 = vpack.c.b16 %v109, %v105
  %v158 = vpack.c.b16 %v110, %v106
  %v159 = vpack.c.b16 %v111, %v107
  %v160 = vpack.c.b16 %v116, %v112
  %v161 = vpack.c.b16 %v117, %v113
  %v162 = vpack.c.b16 %v118, %v114
  %v163 = vpack.c.b16 %v119, %v115
  %v164 = vpack.c.b16 %v124, %v120
  %v165 = vpack.c.b16 %v125, %v121
  %v166 = vpack.c.b16 %v126, %v122
  %v167 = vpack.c.b16 %v127, %v123
  %v168 = vpack.c.b16 %v132, %v128
  %v169 = vpack.c.b16 %v133, %v129
  %v170 = vpack.c.b16 %v134, %v130
  %v171 = vpack.c.b16 %v135, %v131
  %v172 = vpack.c.b16 %v140, %v136
  %v173 = vpack.c.b16 %v141, %v137
  %v174 = vpack.c.b16 %v142, %v138
  %v175 = vpack.c.b16 %v143, %v139
  %208 = vmatprep.subr.bf16.mxu0 %v173
  %209 = vmatpush1.bf16.msra.mxu0 %v172
  %210 = vmatprep.subr.bf16.mxu0 %v169
  %211 = vmatpush1.bf16.msra.mxu0 %v168
  %212 = vmatprep.subr.bf16.mxu0 %v165
  %213 = vmatpush1.bf16.msra.mxu0 %v164
  %214 = vmatprep.subr.bf16.mxu0 %v161
  %215 = vmatpush1.bf16.msra.mxu0 %v160
  %216 = vmatprep.subr.bf16.mxu0 %v157
  %217 = vmatpush1.bf16.msra.mxu0 %v156
  %218 = vmatprep.subr.bf16.mxu0 %v153
  %219 = vmatpush1.bf16.msra.mxu0 %v152
  %220 = vmatprep.subr.bf16.mxu0 %v149
  %221 = vmatpush1.bf16.msra.mxu0 %v148
  %222 = vmatprep.subr.bf16.mxu0 %v145
  %223 = vmatpush1.bf16.msra.mxu0 %v144
  %224 = vmatprep.subr.bf16.mxu0 0
  %225 = vmatpush2.bf16.msra.mxu0 0
  %226 = vmatprep.subr.bf16.mxu0 0
  %227 = vmatpush2.bf16.msra.mxu0 0
  %228 = vmatprep.subr.bf16.mxu0 0
  %229 = vmatpush2.bf16.msra.mxu0 0
  %230 = vmatprep.subr.bf16.mxu0 0
  %231 = vmatpush2.bf16.msra.mxu0 0
  %232 = vmatprep.subr.bf16.mxu0 0
  %233 = vmatpush2.bf16.msra.mxu0 0
  %234 = vmatprep.subr.bf16.mxu0 0
  %235 = vmatpush2.bf16.msra.mxu0 0
  %236 = vmatprep.subr.bf16.mxu0 0
  %237 = vmatpush2.bf16.msra.mxu0 0
  %238 = vmatprep.subr.bf16.mxu0 0
  %239 = vmatpush2.bf16.msra.mxu0 0
  %240 = vmatprep.mubr.bf16.mxu0 0
  %241 = vmatmul.mubr.bf16.gmra.mxu0 0
  %v242 = vpop.f32.mrf.mxu0
  %v243 = vadd.f32 0.0, %v242
  %v244 = vpop.f32.mrf.mxu0
  %v245 = vadd.f32 0.0, %v244
  %v246 = vpop.f32.mrf.mxu0
  %v247 = vpop.f32.mrf.mxu0
  %248 = vdwg.mxu0
  %249 = vmatprep.subr.bf16.mxu0 %v175
  %250 = vmatpush1.bf16.msra.mxu0 %v174
  %251 = vmatprep.subr.bf16.mxu0 %v171
  %252 = vmatpush1.bf16.msra.mxu0 %v170
  %253 = vmatprep.subr.bf16.mxu0 %v167
  %254 = vmatpush1.bf16.msra.mxu0 %v166
  %255 = vmatprep.subr.bf16.mxu0 %v163
  %256 = vmatpush1.bf16.msra.mxu0 %v162
  %257 = vmatprep.subr.bf16.mxu0 %v159
  %258 = vmatpush1.bf16.msra.mxu0 %v158
  %259 = vmatprep.subr.bf16.mxu0 %v155
  %260 = vmatpush1.bf16.msra.mxu0 %v154
  %261 = vmatprep.subr.bf16.mxu0 %v151
  %262 = vmatpush1.bf16.msra.mxu0 %v150
  %263 = vmatprep.subr.bf16.mxu0 %v147
  %264 = vmatpush1.bf16.msra.mxu0 %v146
  %265 = vmatprep.subr.bf16.mxu0 0
  %266 = vmatpush2.bf16.msra.mxu0 0
  %267 = vmatprep.subr.bf16.mxu0 0
  %268 = vmatpush2.bf16.msra.mxu0 0
  %269 = vmatprep.subr.bf16.mxu0 0
  %270 = vmatpush2.bf16.msra.mxu0 0
  %271 = vmatprep.subr.bf16.mxu0 0
  %272 = vmatpush2.bf16.msra.mxu0 0
  %273 = vmatprep.subr.bf16.mxu0 0
  %274 = vmatpush2.bf16.msra.mxu0 0
  %275 = vmatprep.subr.bf16.mxu0 0
  %276 = vmatpush2.bf16.msra.mxu0 0
  %277 = vmatprep.subr.bf16.mxu0 0
  %278 = vmatpush2.bf16.msra.mxu0 0
  %279 = vmatprep.subr.bf16.mxu0 0
  %280 = vmatpush2.bf16.msra.mxu0 0
  %281 = vmatprep.mubr.bf16.mxu0 0
  %282 = vmatmul.mubr.bf16.gmra.mxu0 0
  %v283 = vpop.f32.mrf.mxu0
  %v284 = vadd.f32 0.0, %v283
  %v285 = vpop.f32.mrf.mxu0
  %v286 = vadd.f32 0.0, %v285
  %v287 = vpop.f32.mrf.mxu0
  %v288 = vpop.f32.mrf.mxu0
  %289 = vdwg.mxu0
  %v290 = vadd.f32 %v44, %v243
  %v291 = vadd.f32 %v45, %v245
  %v292 = vadd.f32 %v46, %v284
  %v293 = vadd.f32 %v47, %v286
  %v294 = vxor.u32 %v290, 2147483648
  %v295 = vmul.f32 %v294, 1.442695
  %v296 = vpow.pop %v295
  %v297 = vadd.f32 %v296, 1.0
  %v298 = vrcp.pop %v297
  %v299 = vmul.f32 1.0, %v298
  %v300 = vxor.u32 %v291, 2147483648
  %v301 = vmul.f32 %v300, 1.442695
  %v302 = vpow.pop %v301
  %v303 = vadd.f32 %v302, 1.0
  %v304 = vrcp.pop %v303
  %v305 = vmul.f32 1.0, %v304
  %v306 = vtanh.pop %v292
  %v307 = vxor.u32 %v293, 2147483648
  %v308 = vmul.f32 %v307, 1.442695
  %v309 = vpow.pop %v308
  %v310 = vadd.f32 %v309, 1.0
  %v311 = vrcp.pop %v310
  %v312 = vmul.f32 1.0, %v311
  %v313 = vmul.f32 %v305, 0.0
  %v314 = vmul.f32 %v299, %v306
  %v315 = vadd.f32 %v313, %v314
  %v316 = vtanh.pop %v315
  %v317 = vmul.f32 %v312, %v316
  %v318 = vpack.c.bf16 %v317, %v317
  %319 = vst [vmem:[%s2] sm:$0xf] %v318
  %s320 = scalar_lea.vmem %s0, 32
  %v321 = vld [vmem:[%s320] sm:$0xff]
  %v322 = vld [vmem:[%s320 + $0x8] sm:$0xff]
  %v323 = vld [vmem:[%s320 + $0x10] sm:$0xff]
  %v324 = vld [vmem:[%s320 + $0x18] sm:$0xff]
  %325 = vmatprep.subr.bf16.mxu0 %v173
  %326 = vmatpush1.bf16.msra.mxu0 %v172
  %327 = vmatprep.subr.bf16.mxu0 %v169
  %328 = vmatpush1.bf16.msra.mxu0 %v168
  %329 = vmatprep.subr.bf16.mxu0 %v165
  %330 = vmatpush1.bf16.msra.mxu0 %v164
  %331 = vmatprep.subr.bf16.mxu0 %v161
  %332 = vmatpush1.bf16.msra.mxu0 %v160
  %333 = vmatprep.subr.bf16.mxu0 %v157
  %334 = vmatpush1.bf16.msra.mxu0 %v156
  %335 = vmatprep.subr.bf16.mxu0 %v153
  %336 = vmatpush1.bf16.msra.mxu0 %v152
  %337 = vmatprep.subr.bf16.mxu0 %v149
  %338 = vmatpush1.bf16.msra.mxu0 %v148
  %339 = vmatprep.subr.bf16.mxu0 %v145
  %340 = vmatpush1.bf16.msra.mxu0 %v144
  %341 = vmatprep.subr.bf16.mxu0 0
  %342 = vmatpush2.bf16.msra.mxu0 0
  %343 = vmatprep.subr.bf16.mxu0 0
  %344 = vmatpush2.bf16.msra.mxu0 0
  %345 = vmatprep.subr.bf16.mxu0 0
  %346 = vmatpush2.bf16.msra.mxu0 0
  %347 = vmatprep.subr.bf16.mxu0 0
  %348 = vmatpush2.bf16.msra.mxu0 0
  %349 = vmatprep.subr.bf16.mxu0 0
  %350 = vmatpush2.bf16.msra.mxu0 0
  %351 = vmatprep.subr.bf16.mxu0 0
  %352 = vmatpush2.bf16.msra.mxu0 0
  %353 = vmatprep.subr.bf16.mxu0 0
  %354 = vmatpush2.bf16.msra.mxu0 0
  %355 = vmatprep.subr.bf16.mxu0 0
  %356 = vmatpush2.bf16.msra.mxu0 0
  %357 = vmatprep.mubr.bf16.mxu0 0
  %358 = vmatmul.mubr.bf16.gmra.mxu0 %v318
  %v359 = vpop.f32.mrf.mxu0
  %v360 = vadd.f32 0.0, %v359
  %v361 = vpop.f32.mrf.mxu0
  %v362 = vadd.f32 0.0, %v361
  %v363 = vpop.f32.mrf.mxu0
  %v364 = vpop.f32.mrf.mxu0
  %365 = vdwg.mxu0
  %366 = vmatprep.subr.bf16.mxu0 %v175
  %367 = vmatpush1.bf16.msra.mxu0 %v174
  %368 = vmatprep.subr.bf16.mxu0 %v171
  %369 = vmatpush1.bf16.msra.mxu0 %v170
  %370 = vmatprep.subr.bf16.mxu0 %v167
  %371 = vmatpush1.bf16.msra.mxu0 %v166
  %372 = vmatprep.subr.bf16.mxu0 %v163
  %373 = vmatpush1.bf16.msra.mxu0 %v162
  %374 = vmatprep.subr.bf16.mxu0 %v159
  %375 = vmatpush1.bf16.msra.mxu0 %v158
  %376 = vmatprep.subr.bf16.mxu0 %v155
  %377 = vmatpush1.bf16.msra.mxu0 %v154
  %378 = vmatprep.subr.bf16.mxu0 %v151
  %379 = vmatpush1.bf16.msra.mxu0 %v150
  %380 = vmatprep.subr.bf16.mxu0 %v147
  %381 = vmatpush1.bf16.msra.mxu0 %v146
  %382 = vmatprep.subr.bf16.mxu0 0
  %383 = vmatpush2.bf16.msra.mxu0 0
  %384 = vmatprep.subr.bf16.mxu0 0
  %385 = vmatpush2.bf16.msra.mxu0 0
  %386 = vmatprep.subr.bf16.mxu0 0
  %387 = vmatpush2.bf16.msra.mxu0 0
  %388 = vmatprep.subr.bf16.mxu0 0
  %389 = vmatpush2.bf16.msra.mxu0 0
  %390 = vmatprep.subr.bf16.mxu0 0
  %391 = vmatpush2.bf16.msra.mxu0 0
  %392 = vmatprep.subr.bf16.mxu0 0
  %393 = vmatpush2.bf16.msra.mxu0 0
  %394 = vmatprep.subr.bf16.mxu0 0
  %395 = vmatpush2.bf16.msra.mxu0 0
  %396 = vmatprep.subr.bf16.mxu0 0
  %397 = vmatpush2.bf16.msra.mxu0 0
  %398 = vmatprep.mubr.bf16.mxu0 0
  %399 = vmatmul.mubr.bf16.gmra.mxu0 %v318
  %v400 = vpop.f32.mrf.mxu0
  %v401 = vadd.f32 0.0, %v400
  %v402 = vpop.f32.mrf.mxu0
  %v403 = vadd.f32 0.0, %v402
  %v404 = vpop.f32.mrf.mxu0
  %v405 = vpop.f32.mrf.mxu0
  %406 = vdwg.mxu0
  %v407 = vadd.f32 %v321, %v360
  %v408 = vadd.f32 %v322, %v362
  %v409 = vadd.f32 %v323, %v401
  %v410 = vadd.f32 %v324, %v403
  %v411 = vxor.u32 %v407, 2147483648
  %v412 = vmul.f32 %v411, 1.442695
  %v413 = vpow.pop %v412
  %v414 = vadd.f32 %v413, 1.0
  %v415 = vrcp.pop %v414
  %v416 = vmul.f32 1.0, %v415
  %v417 = vxor.u32 %v408, 2147483648
  %v418 = vmul.f32 %v417, 1.442695
  %v419 = vpow.pop %v418
  %v420 = vadd.f32 %v419, 1.0
  %v421 = vrcp.pop %v420
  %v422 = vmul.f32 1.0, %v421
  %v423 = vtanh.pop %v409
  %v424 = vxor.u32 %v410, 2147483648
  %v425 = vmul.f32 %v424, 1.442695
  %v426 = vpow.pop %v425
  %v427 = vadd.f32 %v426, 1.0
  %v428 = vrcp.pop %v427
  %v429 = vmul.f32 1.0, %v428
  %v430 = vmul.f32 %v422, %v315
  %v431 = vmul.f32 %v416, %v423
  %v432 = vadd.f32 %v430, %v431
  %v433 = vtanh.pop %v432
  %v434 = vmul.f32 %v429, %v433
  %v435 = vpack.c.bf16 %v434, %v434
  %s436 = scalar_lea.vmem %s2, 4
  %437 = vst [vmem:[%s436] sm:$0xf] %v435
  %s438 = scalar_lea.vmem %s0, 64
  %v439 = vld [vmem:[%s438] sm:$0xff]
  %v440 = vld [vmem:[%s438 + $0x8] sm:$0xff]
  %v441 = vld [vmem:[%s438 + $0x10] sm:$0xff]
  %v442 = vld [vmem:[%s438 + $0x18] sm:$0xff]
  %443 = vmatprep.subr.bf16.mxu0 %v173
  %444 = vmatpush1.bf16.msra.mxu0 %v172
  %445 = vmatprep.subr.bf16.mxu0 %v169
  %446 = vmatpush1.bf16.msra.mxu0 %v168
  %447 = vmatprep.subr.bf16.mxu0 %v165
  %448 = vmatpush1.bf16.msra.mxu0 %v164
  %449 = vmatprep.subr.bf16.mxu0 %v161
  %450 = vmatpush1.bf16.msra.mxu0 %v160
  %451 = vmatprep.subr.bf16.mxu0 %v157
  %452 = vmatpush1.bf16.msra.mxu0 %v156
  %453 = vmatprep.subr.bf16.mxu0 %v153
  %454 = vmatpush1.bf16.msra.mxu0 %v152
  %455 = vmatprep.subr.bf16.mxu0 %v149
  %456 = vmatpush1.bf16.msra.mxu0 %v148
  %457 = vmatprep.subr.bf16.mxu0 %v145
  %458 = vmatpush1.bf16.msra.mxu0 %v144
  %459 = vmatprep.subr.bf16.mxu0 0
  %460 = vmatpush2.bf16.msra.mxu0 0
  %461 = vmatprep.subr.bf16.mxu0 0
  %462 = vmatpush2.bf16.msra.mxu0 0
  %463 = vmatprep.subr.bf16.mxu0 0
  %464 = vmatpush2.bf16.msra.mxu0 0
  %465 = vmatprep.subr.bf16.mxu0 0
  %466 = vmatpush2.bf16.msra.mxu0 0
  %467 = vmatprep.subr.bf16.mxu0 0
  %468 = vmatpush2.bf16.msra.mxu0 0
  %469 = vmatprep.subr.bf16.mxu0 0
  %470 = vmatpush2.bf16.msra.mxu0 0
  %471 = vmatprep.subr.bf16.mxu0 0
  %472 = vmatpush2.bf16.msra.mxu0 0
  %473 = vmatprep.subr.bf16.mxu0 0
  %474 = vmatpush2.bf16.msra.mxu0 0
  %475 = vmatprep.mubr.bf16.mxu0 0
  %476 = vmatmul.mubr.bf16.gmra.mxu0 %v435
  %v477 = vpop.f32.mrf.mxu0
  %v478 = vadd.f32 0.0, %v477
  %v479 = vpop.f32.mrf.mxu0
  %v480 = vadd.f32 0.0, %v479
  %v481 = vpop.f32.mrf.mxu0
  %v482 = vpop.f32.mrf.mxu0
  %483 = vdwg.mxu0
  %484 = vmatprep.subr.bf16.mxu0 %v175
  %485 = vmatpush1.bf16.msra.mxu0 %v174
  %486 = vmatprep.subr.bf16.mxu0 %v171
  %487 = vmatpush1.bf16.msra.mxu0 %v170
  %488 = vmatprep.subr.bf16.mxu0 %v167
  %489 = vmatpush1.bf16.msra.mxu0 %v166
  %490 = vmatprep.subr.bf16.mxu0 %v163
  %491 = vmatpush1.bf16.msra.mxu0 %v162
  %492 = vmatprep.subr.bf16.mxu0 %v159
  %493 = vmatpush1.bf16.msra.mxu0 %v158
  %494 = vmatprep.subr.bf16.mxu0 %v155
  %495 = vmatpush1.bf16.msra.mxu0 %v154
  %496 = vmatprep.subr.bf16.mxu0 %v151
  %497 = vmatpush1.bf16.msra.mxu0 %v150
  %498 = vmatprep.subr.bf16.mxu0 %v147
  %499 = vmatpush1.bf16.msra.mxu0 %v146
  %500 = vmatprep.subr.bf16.mxu0 0
  %501 = vmatpush2.bf16.msra.mxu0 0
  %502 = vmatprep.subr.bf16.mxu0 0
  %503 = vmatpush2.bf16.msra.mxu0 0
  %504 = vmatprep.subr.bf16.mxu0 0
  %505 = vmatpush2.bf16.msra.mxu0 0
  %506 = vmatprep.subr.bf16.mxu0 0
  %507 = vmatpush2.bf16.msra.mxu0 0
  %508 = vmatprep.subr.bf16.mxu0 0
  %509 = vmatpush2.bf16.msra.mxu0 0
  %510 = vmatprep.subr.bf16.mxu0 0
  %511 = vmatpush2.bf16.msra.mxu0 0
  %512 = vmatprep.subr.bf16.mxu0 0
  %513 = vmatpush2.bf16.msra.mxu0 0
  %514 = vmatprep.subr.bf16.mxu0 0
  %515 = vmatpush2.bf16.msra.mxu0 0
  %516 = vmatprep.mubr.bf16.mxu0 0
  %517 = vmatmul.mubr.bf16.gmra.mxu0 %v435
  %v518 = vpop.f32.mrf.mxu0
  %v519 = vadd.f32 0.0, %v518
  %v520 = vpop.f32.mrf.mxu0
  %v521 = vadd.f32 0.0, %v520
  %v522 = vpop.f32.mrf.mxu0
  %v523 = vpop.f32.mrf.mxu0
  %524 = vdwg.mxu0
  %v525 = vadd.f32 %v439, %v478
  %v526 = vadd.f32 %v440, %v480
  %v527 = vadd.f32 %v441, %v519
  %v528 = vadd.f32 %v442, %v521
  %v529 = vxor.u32 %v525, 2147483648
  %v530 = vmul.f32 %v529, 1.442695
  %v531 = vpow.pop %v530
  %v532 = vadd.f32 %v531, 1.0
  %v533 = vrcp.pop %v532
  %v534 = vmul.f32 1.0, %v533
  %v535 = vxor.u32 %v526, 2147483648
  %v536 = vmul.f32 %v535, 1.442695
  %v537 = vpow.pop %v536
  %v538 = vadd.f32 %v537, 1.0
  %v539 = vrcp.pop %v538
  %v540 = vmul.f32 1.0, %v539
  %v541 = vtanh.pop %v527
  %v542 = vxor.u32 %v528, 2147483648
  %v543 = vmul.f32 %v542, 1.442695
  %v544 = vpow.pop %v543
  %v545 = vadd.f32 %v544, 1.0
  %v546 = vrcp.pop %v545
  %v547 = vmul.f32 1.0, %v546
  %v548 = vmul.f32 %v540, %v432
  %v549 = vmul.f32 %v534, %v541
  %v550 = vadd.f32 %v548, %v549
  %v551 = vtanh.pop %v550
  %v552 = vmul.f32 %v547, %v551
  %v553 = vpack.c.bf16 %v552, %v552
  %s554 = scalar_lea.vmem %s2, 8
  %555 = vst [vmem:[%s554] sm:$0xf] %v553
  %s556 = scalar_lea.vmem %s0, 96
  %v557 = vld [vmem:[%s556] sm:$0xff]
  %v558 = vld [vmem:[%s556 + $0x8] sm:$0xff]
  %v559 = vld [vmem:[%s556 + $0x10] sm:$0xff]
  %v560 = vld [vmem:[%s556 + $0x18] sm:$0xff]
  %561 = vmatprep.subr.bf16.mxu0 %v173
  %562 = vmatpush1.bf16.msra.mxu0 %v172
  %563 = vmatprep.subr.bf16.mxu0 %v169
  %564 = vmatpush1.bf16.msra.mxu0 %v168
  %565 = vmatprep.subr.bf16.mxu0 %v165
  %566 = vmatpush1.bf16.msra.mxu0 %v164
  %567 = vmatprep.subr.bf16.mxu0 %v161
  %568 = vmatpush1.bf16.msra.mxu0 %v160
  %569 = vmatprep.subr.bf16.mxu0 %v157
  %570 = vmatpush1.bf16.msra.mxu0 %v156
  %571 = vmatprep.subr.bf16.mxu0 %v153
  %572 = vmatpush1.bf16.msra.mxu0 %v152
  %573 = vmatprep.subr.bf16.mxu0 %v149
  %574 = vmatpush1.bf16.msra.mxu0 %v148
  %575 = vmatprep.subr.bf16.mxu0 %v145
  %576 = vmatpush1.bf16.msra.mxu0 %v144
  %577 = vmatprep.subr.bf16.mxu0 0
  %578 = vmatpush2.bf16.msra.mxu0 0
  %579 = vmatprep.subr.bf16.mxu0 0
  %580 = vmatpush2.bf16.msra.mxu0 0
  %581 = vmatprep.subr.bf16.mxu0 0
  %582 = vmatpush2.bf16.msra.mxu0 0
  %583 = vmatprep.subr.bf16.mxu0 0
  %584 = vmatpush2.bf16.msra.mxu0 0
  %585 = vmatprep.subr.bf16.mxu0 0
  %586 = vmatpush2.bf16.msra.mxu0 0
  %587 = vmatprep.subr.bf16.mxu0 0
  %588 = vmatpush2.bf16.msra.mxu0 0
  %589 = vmatprep.subr.bf16.mxu0 0
  %590 = vmatpush2.bf16.msra.mxu0 0
  %591 = vmatprep.subr.bf16.mxu0 0
  %592 = vmatpush2.bf16.msra.mxu0 0
  %593 = vmatprep.mubr.bf16.mxu0 0
  %594 = vmatmul.mubr.bf16.gmra.mxu0 %v553
  %v595 = vpop.f32.mrf.mxu0
  %v596 = vadd.f32 0.0, %v595
  %v597 = vpop.f32.mrf.mxu0
  %v598 = vadd.f32 0.0, %v597
  %v599 = vpop.f32.mrf.mxu0
  %v600 = vpop.f32.mrf.mxu0
  %601 = vdwg.mxu0
  %602 = vmatprep.subr.bf16.mxu0 %v175
  %603 = vmatpush1.bf16.msra.mxu0 %v174
  %604 = vmatprep.subr.bf16.mxu0 %v171
  %605 = vmatpush1.bf16.msra.mxu0 %v170
  %606 = vmatprep.subr.bf16.mxu0 %v167
  %607 = vmatpush1.bf16.msra.mxu0 %v166
  %608 = vmatprep.subr.bf16.mxu0 %v163
  %609 = vmatpush1.bf16.msra.mxu0 %v162
  %610 = vmatprep.subr.bf16.mxu0 %v159
  %611 = vmatpush1.bf16.msra.mxu0 %v158
  %612 = vmatprep.subr.bf16.mxu0 %v155
  %613 = vmatpush1.bf16.msra.mxu0 %v154
  %614 = vmatprep.subr.bf16.mxu0 %v151
  %615 = vmatpush1.bf16.msra.mxu0 %v150
  %616 = vmatprep.subr.bf16.mxu0 %v147
  %617 = vmatpush1.bf16.msra.mxu0 %v146
  %618 = vmatprep.subr.bf16.mxu0 0
  %619 = vmatpush2.bf16.msra.mxu0 0
  %620 = vmatprep.subr.bf16.mxu0 0
  %621 = vmatpush2.bf16.msra.mxu0 0
  %622 = vmatprep.subr.bf16.mxu0 0
  %623 = vmatpush2.bf16.msra.mxu0 0
  %624 = vmatprep.subr.bf16.mxu0 0
  %625 = vmatpush2.bf16.msra.mxu0 0
  %626 = vmatprep.subr.bf16.mxu0 0
  %627 = vmatpush2.bf16.msra.mxu0 0
  %628 = vmatprep.subr.bf16.mxu0 0
  %629 = vmatpush2.bf16.msra.mxu0 0
  %630 = vmatprep.subr.bf16.mxu0 0
  %631 = vmatpush2.bf16.msra.mxu0 0
  %632 = vmatprep.subr.bf16.mxu0 0
  %633 = vmatpush2.bf16.msra.mxu0 0
  %634 = vmatprep.mubr.bf16.mxu0 0
  %635 = vmatmul.mubr.bf16.gmra.mxu0 %v553
  %v636 = vpop.f32.mrf.mxu0
  %v637 = vadd.f32 0.0, %v636
  %v638 = vpop.f32.mrf.mxu0
  %v639 = vadd.f32 0.0, %v638
  %v640 = vpop.f32.mrf.mxu0
  %v641 = vpop.f32.mrf.mxu0
  %642 = vdwg.mxu0
  %v643 = vadd.f32 %v557, %v596
  %v644 = vadd.f32 %v558, %v598
  %v645 = vadd.f32 %v559, %v637
  %v646 = vadd.f32 %v560, %v639
  %v647 = vxor.u32 %v643, 2147483648
  %v648 = vmul.f32 %v647, 1.442695
  %v649 = vpow.pop %v648
  %v650 = vadd.f32 %v649, 1.0
  %v651 = vrcp.pop %v650
  %v652 = vmul.f32 1.0, %v651
  %v653 = vxor.u32 %v644, 2147483648
  %v654 = vmul.f32 %v653, 1.442695
  %v655 = vpow.pop %v654
  %v656 = vadd.f32 %v655, 1.0
  %v657 = vrcp.pop %v656
  %v658 = vmul.f32 1.0, %v657
  %v659 = vtanh.pop %v645
  %v660 = vxor.u32 %v646, 2147483648
  %v661 = vmul.f32 %v660, 1.442695
  %v662 = vpow.pop %v661
  %v663 = vadd.f32 %v662, 1.0
  %v664 = vrcp.pop %v663
  %v665 = vmul.f32 1.0, %v664
  %v666 = vmul.f32 %v658, %v550
  %v667 = vmul.f32 %v652, %v659
  %v668 = vadd.f32 %v666, %v667
  %v669 = vtanh.pop %v668
  %v670 = vmul.f32 %v665, %v669
  %v671 = vpack.c.bf16 %v670, %v670
  %s672 = scalar_lea.vmem %s2, 12
  %673 = vst [vmem:[%s672] sm:$0xf] %v671
  %s674 = scalar_lea.vmem %s0, 128
  %v675 = vld [vmem:[%s674] sm:$0xff]
  %v676 = vld [vmem:[%s674 + $0x8] sm:$0xff]
  %v677 = vld [vmem:[%s674 + $0x10] sm:$0xff]
  %v678 = vld [vmem:[%s674 + $0x18] sm:$0xff]
  %679 = vmatprep.subr.bf16.mxu0 %v173
  %680 = vmatpush1.bf16.msra.mxu0 %v172
  %681 = vmatprep.subr.bf16.mxu0 %v169
  %682 = vmatpush1.bf16.msra.mxu0 %v168
  %683 = vmatprep.subr.bf16.mxu0 %v165
  %684 = vmatpush1.bf16.msra.mxu0 %v164
  %685 = vmatprep.subr.bf16.mxu0 %v161
  %686 = vmatpush1.bf16.msra.mxu0 %v160
  %687 = vmatprep.subr.bf16.mxu0 %v157
  %688 = vmatpush1.bf16.msra.mxu0 %v156
  %689 = vmatprep.subr.bf16.mxu0 %v153
  %690 = vmatpush1.bf16.msra.mxu0 %v152
  %691 = vmatprep.subr.bf16.mxu0 %v149
  %692 = vmatpush1.bf16.msra.mxu0 %v148
  %693 = vmatprep.subr.bf16.mxu0 %v145
  %694 = vmatpush1.bf16.msra.mxu0 %v144
  %695 = vmatprep.subr.bf16.mxu0 0
  %696 = vmatpush2.bf16.msra.mxu0 0
  %697 = vmatprep.subr.bf16.mxu0 0
  %698 = vmatpush2.bf16.msra.mxu0 0
  %699 = vmatprep.subr.bf16.mxu0 0
  %700 = vmatpush2.bf16.msra.mxu0 0
  %701 = vmatprep.subr.bf16.mxu0 0
  %702 = vmatpush2.bf16.msra.mxu0 0
  %703 = vmatprep.subr.bf16.mxu0 0
  %704 = vmatpush2.bf16.msra.mxu0 0
  %705 = vmatprep.subr.bf16.mxu0 0
  %706 = vmatpush2.bf16.msra.mxu0 0
  %707 = vmatprep.subr.bf16.mxu0 0
  %708 = vmatpush2.bf16.msra.mxu0 0
  %709 = vmatprep.subr.bf16.mxu0 0
  %710 = vmatpush2.bf16.msra.mxu0 0
  %711 = vmatprep.mubr.bf16.mxu0 0
  %712 = vmatmul.mubr.bf16.gmra.mxu0 %v671
  %v713 = vpop.f32.mrf.mxu0
  %v714 = vadd.f32 0.0, %v713
  %v715 = vpop.f32.mrf.mxu0
  %v716 = vadd.f32 0.0, %v715
  %v717 = vpop.f32.mrf.mxu0
  %v718 = vpop.f32.mrf.mxu0
  %719 = vdwg.mxu0
  %720 = vmatprep.subr.bf16.mxu0 %v175
  %721 = vmatpush1.bf16.msra.mxu0 %v174
  %722 = vmatprep.subr.bf16.mxu0 %v171
  %723 = vmatpush1.bf16.msra.mxu0 %v170
  %724 = vmatprep.subr.bf16.mxu0 %v167
  %725 = vmatpush1.bf16.msra.mxu0 %v166
  %726 = vmatprep.subr.bf16.mxu0 %v163
  %727 = vmatpush1.bf16.msra.mxu0 %v162
  %728 = vmatprep.subr.bf16.mxu0 %v159
  %729 = vmatpush1.bf16.msra.mxu0 %v158
  %730 = vmatprep.subr.bf16.mxu0 %v155
  %731 = vmatpush1.bf16.msra.mxu0 %v154
  %732 = vmatprep.subr.bf16.mxu0 %v151
  %733 = vmatpush1.bf16.msra.mxu0 %v150
  %734 = vmatprep.subr.bf16.mxu0 %v147
  %735 = vmatpush1.bf16.msra.mxu0 %v146
  %736 = vmatprep.subr.bf16.mxu0 0
  %737 = vmatpush2.bf16.msra.mxu0 0
  %738 = vmatprep.subr.bf16.mxu0 0
  %739 = vmatpush2.bf16.msra.mxu0 0
  %740 = vmatprep.subr.bf16.mxu0 0
  %741 = vmatpush2.bf16.msra.mxu0 0
  %742 = vmatprep.subr.bf16.mxu0 0
  %743 = vmatpush2.bf16.msra.mxu0 0
  %744 = vmatprep.subr.bf16.mxu0 0
  %745 = vmatpush2.bf16.msra.mxu0 0
  %746 = vmatprep.subr.bf16.mxu0 0
  %747 = vmatpush2.bf16.msra.mxu0 0
  %748 = vmatprep.subr.bf16.mxu0 0
  %749 = vmatpush2.bf16.msra.mxu0 0
  %750 = vmatprep.subr.bf16.mxu0 0
  %751 = vmatpush2.bf16.msra.mxu0 0
  %752 = vmatprep.mubr.bf16.mxu0 0
  %753 = vmatmul.mubr.bf16.gmra.mxu0 %v671
  %v754 = vpop.f32.mrf.mxu0
  %v755 = vadd.f32 0.0, %v754
  %v756 = vpop.f32.mrf.mxu0
  %v757 = vadd.f32 0.0, %v756
  %v758 = vpop.f32.mrf.mxu0
  %v759 = vpop.f32.mrf.mxu0
  %760 = vdwg.mxu0
  %v761 = vadd.f32 %v675, %v714
  %v762 = vadd.f32 %v676, %v716
  %v763 = vadd.f32 %v677, %v755
  %v764 = vadd.f32 %v678, %v757
  %v765 = vxor.u32 %v761, 2147483648
  %v766 = vmul.f32 %v765, 1.442695
  %v767 = vpow.pop %v766
  %v768 = vadd.f32 %v767, 1.0
  %v769 = vrcp.pop %v768
  %v770 = vmul.f32 1.0, %v769
  %v771 = vxor.u32 %v762, 2147483648
  %v772 = vmul.f32 %v771, 1.442695
  %v773 = vpow.pop %v772
  %v774 = vadd.f32 %v773, 1.0
  %v775 = vrcp.pop %v774
  %v776 = vmul.f32 1.0, %v775
  %v777 = vtanh.pop %v763
  %v778 = vxor.u32 %v764, 2147483648
  %v779 = vmul.f32 %v778, 1.442695
  %v780 = vpow.pop %v779
  %v781 = vadd.f32 %v780, 1.0
  %v782 = vrcp.pop %v781
  %v783 = vmul.f32 1.0, %v782
  %v784 = vmul.f32 %v776, %v668
  %v785 = vmul.f32 %v770, %v777
  %v786 = vadd.f32 %v784, %v785
  %v787 = vtanh.pop %v786
  %v788 = vmul.f32 %v783, %v787
  %v789 = vpack.c.bf16 %v788, %v788
  %s790 = scalar_lea.vmem %s2, 16
  %791 = vst [vmem:[%s790] sm:$0xf] %v789
  %s792 = scalar_lea.vmem %s0, 160
  %v793 = vld [vmem:[%s792] sm:$0xff]
  %v794 = vld [vmem:[%s792 + $0x8] sm:$0xff]
  %v795 = vld [vmem:[%s792 + $0x10] sm:$0xff]
  %v796 = vld [vmem:[%s792 + $0x18] sm:$0xff]
  %797 = vmatprep.subr.bf16.mxu0 %v173
  %798 = vmatpush1.bf16.msra.mxu0 %v172
  %799 = vmatprep.subr.bf16.mxu0 %v169
  %800 = vmatpush1.bf16.msra.mxu0 %v168
  %801 = vmatprep.subr.bf16.mxu0 %v165
  %802 = vmatpush1.bf16.msra.mxu0 %v164
  %803 = vmatprep.subr.bf16.mxu0 %v161
  %804 = vmatpush1.bf16.msra.mxu0 %v160
  %805 = vmatprep.subr.bf16.mxu0 %v157
  %806 = vmatpush1.bf16.msra.mxu0 %v156
  %807 = vmatprep.subr.bf16.mxu0 %v153
  %808 = vmatpush1.bf16.msra.mxu0 %v152
  %809 = vmatprep.subr.bf16.mxu0 %v149
  %810 = vmatpush1.bf16.msra.mxu0 %v148
  %811 = vmatprep.subr.bf16.mxu0 %v145
  %812 = vmatpush1.bf16.msra.mxu0 %v144
  %813 = vmatprep.subr.bf16.mxu0 0
  %814 = vmatpush2.bf16.msra.mxu0 0
  %815 = vmatprep.subr.bf16.mxu0 0
  %816 = vmatpush2.bf16.msra.mxu0 0
  %817 = vmatprep.subr.bf16.mxu0 0
  %818 = vmatpush2.bf16.msra.mxu0 0
  %819 = vmatprep.subr.bf16.mxu0 0
  %820 = vmatpush2.bf16.msra.mxu0 0
  %821 = vmatprep.subr.bf16.mxu0 0
  %822 = vmatpush2.bf16.msra.mxu0 0
  %823 = vmatprep.subr.bf16.mxu0 0
  %824 = vmatpush2.bf16.msra.mxu0 0
  %825 = vmatprep.subr.bf16.mxu0 0
  %826 = vmatpush2.bf16.msra.mxu0 0
  %827 = vmatprep.subr.bf16.mxu0 0
  %828 = vmatpush2.bf16.msra.mxu0 0
  %829 = vmatprep.mubr.bf16.mxu0 0
  %830 = vmatmul.mubr.bf16.gmra.mxu0 %v789
  %v831 = vpop.f32.mrf.mxu0
  %v832 = vadd.f32 0.0, %v831
  %v833 = vpop.f32.mrf.mxu0
  %v834 = vadd.f32 0.0, %v833
  %v835 = vpop.f32.mrf.mxu0
  %v836 = vpop.f32.mrf.mxu0
  %837 = vdwg.mxu0
  %838 = vmatprep.subr.bf16.mxu0 %v175
  %839 = vmatpush1.bf16.msra.mxu0 %v174
  %840 = vmatprep.subr.bf16.mxu0 %v171
  %841 = vmatpush1.bf16.msra.mxu0 %v170
  %842 = vmatprep.subr.bf16.mxu0 %v167
  %843 = vmatpush1.bf16.msra.mxu0 %v166
  %844 = vmatprep.subr.bf16.mxu0 %v163
  %845 = vmatpush1.bf16.msra.mxu0 %v162
  %846 = vmatprep.subr.bf16.mxu0 %v159
  %847 = vmatpush1.bf16.msra.mxu0 %v158
  %848 = vmatprep.subr.bf16.mxu0 %v155
  %849 = vmatpush1.bf16.msra.mxu0 %v154
  %850 = vmatprep.subr.bf16.mxu0 %v151
  %851 = vmatpush1.bf16.msra.mxu0 %v150
  %852 = vmatprep.subr.bf16.mxu0 %v147
  %853 = vmatpush1.bf16.msra.mxu0 %v146
  %854 = vmatprep.subr.bf16.mxu0 0
  %855 = vmatpush2.bf16.msra.mxu0 0
  %856 = vmatprep.subr.bf16.mxu0 0
  %857 = vmatpush2.bf16.msra.mxu0 0
  %858 = vmatprep.subr.bf16.mxu0 0
  %859 = vmatpush2.bf16.msra.mxu0 0
  %860 = vmatprep.subr.bf16.mxu0 0
  %861 = vmatpush2.bf16.msra.mxu0 0
  %862 = vmatprep.subr.bf16.mxu0 0
  %863 = vmatpush2.bf16.msra.mxu0 0
  %864 = vmatprep.subr.bf16.mxu0 0
  %865 = vmatpush2.bf16.msra.mxu0 0
  %866 = vmatprep.subr.bf16.mxu0 0
  %867 = vmatpush2.bf16.msra.mxu0 0
  %868 = vmatprep.subr.bf16.mxu0 0
  %869 = vmatpush2.bf16.msra.mxu0 0
  %870 = vmatprep.mubr.bf16.mxu0 0
  %871 = vmatmul.mubr.bf16.gmra.mxu0 %v789
  %v872 = vpop.f32.mrf.mxu0
  %v873 = vadd.f32 0.0, %v872
  %v874 = vpop.f32.mrf.mxu0
  %v875 = vadd.f32 0.0, %v874
  %v876 = vpop.f32.mrf.mxu0
  %v877 = vpop.f32.mrf.mxu0
  %878 = vdwg.mxu0
  %v879 = vadd.f32 %v793, %v832
  %v880 = vadd.f32 %v794, %v834
  %v881 = vadd.f32 %v795, %v873
  %v882 = vadd.f32 %v796, %v875
  %v883 = vxor.u32 %v879, 2147483648
  %v884 = vmul.f32 %v883, 1.442695
  %v885 = vpow.pop %v884
  %v886 = vadd.f32 %v885, 1.0
  %v887 = vrcp.pop %v886
  %v888 = vmul.f32 1.0, %v887
  %v889 = vxor.u32 %v880, 2147483648
  %v890 = vmul.f32 %v889, 1.442695
  %v891 = vpow.pop %v890
  %v892 = vadd.f32 %v891, 1.0
  %v893 = vrcp.pop %v892
  %v894 = vmul.f32 1.0, %v893
  %v895 = vtanh.pop %v881
  %v896 = vxor.u32 %v882, 2147483648
  %v897 = vmul.f32 %v896, 1.442695
  %v898 = vpow.pop %v897
  %v899 = vadd.f32 %v898, 1.0
  %v900 = vrcp.pop %v899
  %v901 = vmul.f32 1.0, %v900
  %v902 = vmul.f32 %v894, %v786
  %v903 = vmul.f32 %v888, %v895
  %v904 = vadd.f32 %v902, %v903
  %v905 = vtanh.pop %v904
  %v906 = vmul.f32 %v901, %v905
  %v907 = vpack.c.bf16 %v906, %v906
  %s908 = scalar_lea.vmem %s2, 20
  %909 = vst [vmem:[%s908] sm:$0xf] %v907
  %s910 = scalar_lea.vmem %s0, 192
  %v911 = vld [vmem:[%s910] sm:$0xff]
  %v912 = vld [vmem:[%s910 + $0x8] sm:$0xff]
  %v913 = vld [vmem:[%s910 + $0x10] sm:$0xff]
  %v914 = vld [vmem:[%s910 + $0x18] sm:$0xff]
  %915 = vmatprep.subr.bf16.mxu0 %v173
  %916 = vmatpush1.bf16.msra.mxu0 %v172
  %917 = vmatprep.subr.bf16.mxu0 %v169
  %918 = vmatpush1.bf16.msra.mxu0 %v168
  %919 = vmatprep.subr.bf16.mxu0 %v165
  %920 = vmatpush1.bf16.msra.mxu0 %v164
  %921 = vmatprep.subr.bf16.mxu0 %v161
  %922 = vmatpush1.bf16.msra.mxu0 %v160
  %923 = vmatprep.subr.bf16.mxu0 %v157
  %924 = vmatpush1.bf16.msra.mxu0 %v156
  %925 = vmatprep.subr.bf16.mxu0 %v153
  %926 = vmatpush1.bf16.msra.mxu0 %v152
  %927 = vmatprep.subr.bf16.mxu0 %v149
  %928 = vmatpush1.bf16.msra.mxu0 %v148
  %929 = vmatprep.subr.bf16.mxu0 %v145
  %930 = vmatpush1.bf16.msra.mxu0 %v144
  %931 = vmatprep.subr.bf16.mxu0 0
  %932 = vmatpush2.bf16.msra.mxu0 0
  %933 = vmatprep.subr.bf16.mxu0 0
  %934 = vmatpush2.bf16.msra.mxu0 0
  %935 = vmatprep.subr.bf16.mxu0 0
  %936 = vmatpush2.bf16.msra.mxu0 0
  %937 = vmatprep.subr.bf16.mxu0 0
  %938 = vmatpush2.bf16.msra.mxu0 0
  %939 = vmatprep.subr.bf16.mxu0 0
  %940 = vmatpush2.bf16.msra.mxu0 0
  %941 = vmatprep.subr.bf16.mxu0 0
  %942 = vmatpush2.bf16.msra.mxu0 0
  %943 = vmatprep.subr.bf16.mxu0 0
  %944 = vmatpush2.bf16.msra.mxu0 0
  %945 = vmatprep.subr.bf16.mxu0 0
  %946 = vmatpush2.bf16.msra.mxu0 0
  %947 = vmatprep.mubr.bf16.mxu0 0
  %948 = vmatmul.mubr.bf16.gmra.mxu0 %v907
  %v949 = vpop.f32.mrf.mxu0
  %v950 = vadd.f32 0.0, %v949
  %v951 = vpop.f32.mrf.mxu0
  %v952 = vadd.f32 0.0, %v951
  %v953 = vpop.f32.mrf.mxu0
  %v954 = vpop.f32.mrf.mxu0
  %955 = vdwg.mxu0
  %956 = vmatprep.subr.bf16.mxu0 %v175
  %957 = vmatpush1.bf16.msra.mxu0 %v174
  %958 = vmatprep.subr.bf16.mxu0 %v171
  %959 = vmatpush1.bf16.msra.mxu0 %v170
  %960 = vmatprep.subr.bf16.mxu0 %v167
  %961 = vmatpush1.bf16.msra.mxu0 %v166
  %962 = vmatprep.subr.bf16.mxu0 %v163
  %963 = vmatpush1.bf16.msra.mxu0 %v162
  %964 = vmatprep.subr.bf16.mxu0 %v159
  %965 = vmatpush1.bf16.msra.mxu0 %v158
  %966 = vmatprep.subr.bf16.mxu0 %v155
  %967 = vmatpush1.bf16.msra.mxu0 %v154
  %968 = vmatprep.subr.bf16.mxu0 %v151
  %969 = vmatpush1.bf16.msra.mxu0 %v150
  %970 = vmatprep.subr.bf16.mxu0 %v147
  %971 = vmatpush1.bf16.msra.mxu0 %v146
  %972 = vmatprep.subr.bf16.mxu0 0
  %973 = vmatpush2.bf16.msra.mxu0 0
  %974 = vmatprep.subr.bf16.mxu0 0
  %975 = vmatpush2.bf16.msra.mxu0 0
  %976 = vmatprep.subr.bf16.mxu0 0
  %977 = vmatpush2.bf16.msra.mxu0 0
  %978 = vmatprep.subr.bf16.mxu0 0
  %979 = vmatpush2.bf16.msra.mxu0 0
  %980 = vmatprep.subr.bf16.mxu0 0
  %981 = vmatpush2.bf16.msra.mxu0 0
  %982 = vmatprep.subr.bf16.mxu0 0
  %983 = vmatpush2.bf16.msra.mxu0 0
  %984 = vmatprep.subr.bf16.mxu0 0
  %985 = vmatpush2.bf16.msra.mxu0 0
  %986 = vmatprep.subr.bf16.mxu0 0
  %987 = vmatpush2.bf16.msra.mxu0 0
  %988 = vmatprep.mubr.bf16.mxu0 0
  %989 = vmatmul.mubr.bf16.gmra.mxu0 %v907
  %v990 = vpop.f32.mrf.mxu0
  %v991 = vadd.f32 0.0, %v990
  %v992 = vpop.f32.mrf.mxu0
  %v993 = vadd.f32 0.0, %v992
  %v994 = vpop.f32.mrf.mxu0
  %v995 = vpop.f32.mrf.mxu0
  %996 = vdwg.mxu0
  %v997 = vadd.f32 %v911, %v950
  %v998 = vadd.f32 %v912, %v952
  %v999 = vadd.f32 %v913, %v991
  %v1000 = vadd.f32 %v914, %v993
  %v1001 = vxor.u32 %v997, 2147483648
  %v1002 = vmul.f32 %v1001, 1.442695
  %v1003 = vpow.pop %v1002
  %v1004 = vadd.f32 %v1003, 1.0
  %v1005 = vrcp.pop %v1004
  %v1006 = vmul.f32 1.0, %v1005
  %v1007 = vxor.u32 %v998, 2147483648
  %v1008 = vmul.f32 %v1007, 1.442695
  %v1009 = vpow.pop %v1008
  %v1010 = vadd.f32 %v1009, 1.0
  %v1011 = vrcp.pop %v1010
  %v1012 = vmul.f32 1.0, %v1011
  %v1013 = vtanh.pop %v999
  %v1014 = vxor.u32 %v1000, 2147483648
  %v1015 = vmul.f32 %v1014, 1.442695
  %v1016 = vpow.pop %v1015
  %v1017 = vadd.f32 %v1016, 1.0
  %v1018 = vrcp.pop %v1017
  %v1019 = vmul.f32 1.0, %v1018
  %v1020 = vmul.f32 %v1012, %v904
  %v1021 = vmul.f32 %v1006, %v1013
  %v1022 = vadd.f32 %v1020, %v1021
  %v1023 = vtanh.pop %v1022
  %v1024 = vmul.f32 %v1019, %v1023
  %v1025 = vpack.c.bf16 %v1024, %v1024
  %s1026 = scalar_lea.vmem %s2, 24
  %1027 = vst [vmem:[%s1026] sm:$0xf] %v1025
  %s1028 = scalar_lea.vmem %s0, 224
  %v1029 = vld [vmem:[%s1028] sm:$0xff]
  %v1030 = vld [vmem:[%s1028 + $0x8] sm:$0xff]
  %v1031 = vld [vmem:[%s1028 + $0x10] sm:$0xff]
  %v1032 = vld [vmem:[%s1028 + $0x18] sm:$0xff]
  %1033 = vmatprep.subr.bf16.mxu0 %v173
  %1034 = vmatpush1.bf16.msra.mxu0 %v172
  %1035 = vmatprep.subr.bf16.mxu0 %v169
  %1036 = vmatpush1.bf16.msra.mxu0 %v168
  %1037 = vmatprep.subr.bf16.mxu0 %v165
  %1038 = vmatpush1.bf16.msra.mxu0 %v164
  %1039 = vmatprep.subr.bf16.mxu0 %v161
  %1040 = vmatpush1.bf16.msra.mxu0 %v160
  %1041 = vmatprep.subr.bf16.mxu0 %v157
  %1042 = vmatpush1.bf16.msra.mxu0 %v156
  %1043 = vmatprep.subr.bf16.mxu0 %v153
  %1044 = vmatpush1.bf16.msra.mxu0 %v152
  %1045 = vmatprep.subr.bf16.mxu0 %v149
  %1046 = vmatpush1.bf16.msra.mxu0 %v148
  %1047 = vmatprep.subr.bf16.mxu0 %v145
  %1048 = vmatpush1.bf16.msra.mxu0 %v144
  %1049 = vmatprep.subr.bf16.mxu0 0
  %1050 = vmatpush2.bf16.msra.mxu0 0
  %1051 = vmatprep.subr.bf16.mxu0 0
  %1052 = vmatpush2.bf16.msra.mxu0 0
  %1053 = vmatprep.subr.bf16.mxu0 0
  %1054 = vmatpush2.bf16.msra.mxu0 0
  %1055 = vmatprep.subr.bf16.mxu0 0
  %1056 = vmatpush2.bf16.msra.mxu0 0
  %1057 = vmatprep.subr.bf16.mxu0 0
  %1058 = vmatpush2.bf16.msra.mxu0 0
  %1059 = vmatprep.subr.bf16.mxu0 0
  %1060 = vmatpush2.bf16.msra.mxu0 0
  %1061 = vmatprep.subr.bf16.mxu0 0
  %1062 = vmatpush2.bf16.msra.mxu0 0
  %1063 = vmatprep.subr.bf16.mxu0 0
  %1064 = vmatpush2.bf16.msra.mxu0 0
  %1065 = vmatprep.mubr.bf16.mxu0 0
  %1066 = vmatmul.mubr.bf16.gmra.mxu0 %v1025
  %v1067 = vpop.f32.mrf.mxu0
  %v1068 = vadd.f32 0.0, %v1067
  %v1069 = vpop.f32.mrf.mxu0
  %v1070 = vadd.f32 0.0, %v1069
  %v1071 = vpop.f32.mrf.mxu0
  %v1072 = vpop.f32.mrf.mxu0
  %1073 = vdwg.mxu0
  %1074 = vmatprep.subr.bf16.mxu0 %v175
  %1075 = vmatpush1.bf16.msra.mxu0 %v174
  %1076 = vmatprep.subr.bf16.mxu0 %v171
  %1077 = vmatpush1.bf16.msra.mxu0 %v170
  %1078 = vmatprep.subr.bf16.mxu0 %v167
  %1079 = vmatpush1.bf16.msra.mxu0 %v166
  %1080 = vmatprep.subr.bf16.mxu0 %v163
  %1081 = vmatpush1.bf16.msra.mxu0 %v162
  %1082 = vmatprep.subr.bf16.mxu0 %v159
  %1083 = vmatpush1.bf16.msra.mxu0 %v158
  %1084 = vmatprep.subr.bf16.mxu0 %v155
  %1085 = vmatpush1.bf16.msra.mxu0 %v154
  %1086 = vmatprep.subr.bf16.mxu0 %v151
  %1087 = vmatpush1.bf16.msra.mxu0 %v150
  %1088 = vmatprep.subr.bf16.mxu0 %v147
  %1089 = vmatpush1.bf16.msra.mxu0 %v146
  %1090 = vmatprep.subr.bf16.mxu0 0
  %1091 = vmatpush2.bf16.msra.mxu0 0
  %1092 = vmatprep.subr.bf16.mxu0 0
  %1093 = vmatpush2.bf16.msra.mxu0 0
  %1094 = vmatprep.subr.bf16.mxu0 0
  %1095 = vmatpush2.bf16.msra.mxu0 0
  %1096 = vmatprep.subr.bf16.mxu0 0
  %1097 = vmatpush2.bf16.msra.mxu0 0
  %1098 = vmatprep.subr.bf16.mxu0 0
  %1099 = vmatpush2.bf16.msra.mxu0 0
  %1100 = vmatprep.subr.bf16.mxu0 0
  %1101 = vmatpush2.bf16.msra.mxu0 0
  %1102 = vmatprep.subr.bf16.mxu0 0
  %1103 = vmatpush2.bf16.msra.mxu0 0
  %1104 = vmatprep.subr.bf16.mxu0 0
  %1105 = vmatpush2.bf16.msra.mxu0 0
  %1106 = vmatprep.mubr.bf16.mxu0 0
  %1107 = vmatmul.mubr.bf16.gmra.mxu0 %v1025
  %v1108 = vpop.f32.mrf.mxu0
  %v1109 = vadd.f32 0.0, %v1108
  %v1110 = vpop.f32.mrf.mxu0
  %v1111 = vadd.f32 0.0, %v1110
  %v1112 = vpop.f32.mrf.mxu0
  %v1113 = vpop.f32.mrf.mxu0
  %1114 = vdwg.mxu0
  %v1115 = vadd.f32 %v1029, %v1068
  %v1116 = vadd.f32 %v1030, %v1070
  %v1117 = vadd.f32 %v1031, %v1109
  %v1118 = vadd.f32 %v1032, %v1111
  %v1119 = vxor.u32 %v1115, 2147483648
  %v1120 = vmul.f32 %v1119, 1.442695
  %v1121 = vpow.pop %v1120
  %v1122 = vadd.f32 %v1121, 1.0
  %v1123 = vrcp.pop %v1122
  %v1124 = vmul.f32 1.0, %v1123
  %v1125 = vxor.u32 %v1116, 2147483648
  %v1126 = vmul.f32 %v1125, 1.442695
  %v1127 = vpow.pop %v1126
  %v1128 = vadd.f32 %v1127, 1.0
  %v1129 = vrcp.pop %v1128
  %v1130 = vmul.f32 1.0, %v1129
  %v1131 = vtanh.pop %v1117
  %v1132 = vxor.u32 %v1118, 2147483648
  %v1133 = vmul.f32 %v1132, 1.442695
  %v1134 = vpow.pop %v1133
  %v1135 = vadd.f32 %v1134, 1.0
  %v1136 = vrcp.pop %v1135
  %v1137 = vmul.f32 1.0, %v1136
  %v1138 = vmul.f32 %v1130, %v1022
  %v1139 = vmul.f32 %v1124, %v1131
  %v1140 = vadd.f32 %v1138, %v1139
  %v1141 = vtanh.pop %v1140
  %v1142 = vmul.f32 %v1137, %v1141
  %v1143 = vpack.c.bf16 %v1142, %v1142
  %s1144 = scalar_lea.vmem %s2, 28
  %1145 = vst [vmem:[%s1144] sm:$0xf] %v1143
  // Predicated region
  $region10: #{_lambda_.4} parent=0 // pred_check
    _
  $region11: #{_lambda_.4} parent=0 // pred_check_branch
    %1147 = sbr.rel (0) target = $region13
  $region12: #{_lambda_.4} parent=0 // pred_region
    _
  $region13: #{_lambda_.4} parent=0 // pred_fallthru
    _
  // Predicated region
  $region14: #{_lambda_.4} parent=0 // pred_check
    _
  $region15: #{_lambda_.4} parent=0 // pred_check_branch
    %1149 = sbr.rel (0) target = $region17
  $region16: #{_lambda_.4} parent=0 // pred_region
    _
  $region17: #{_lambda_.4} parent=0 // pred_fallthru
    _

</llo_original>
